<compile_context>
chip_gen: v7x
topology: tpu7x:2x2x1
jax: 0.10.0
libtpu: 0.0.40
codegen_flags: <defaults>
</compile_context>

<pallas_src>
import functools

import jax
import jax.numpy as jnp
from jax.experimental import pallas as pl
from jax.experimental.pallas import tpu as pltpu


def _fused_cnn_kernel(xw_ref, w1_ref, b1_ref, w2_ref, b2_ref, out_ref,
                      p1_ref, p2_ref, h_ref, *,
                      WP, K1h, K1w, K2h, K2w, C1, OC1, LANES, TAIL):
    """Whole CNN forward for B images (one per 128-lane slab), on-chip.

    xw_ref : (C1, LANES+TAIL)     padded inputs, image b in lanes [b*128, b*128+121)
    w1_ref : (OC1, K1h*K1w*C1)    conv1 weights, tap-major columns
    b1_ref : (OC1, 1)
    w2_ref : (OC2, K2h*K2w*OC1)   conv2 weights, tap-major columns
    b2_ref : (OC2, 1)
    out_ref: (OC2, LANES)         lane-dense conv2 output slab (strided layout)
    p1_ref : (K1h*K1w*C1, LANES)  im2col scratch for conv1
    p2_ref : (K2h*K2w*OC1, LANES) im2col scratch for conv2
    h_ref  : (OC1, LANES+TAIL)    conv1 activation (stays in VMEM)
    """
    xrows = xw_ref[...]                                   # (C1, LANES+TAIL)

    # ---- conv1: im2col into scratch, then ONE MXU dot ----
    for kh in range(K1h):
        for kw in range(K1w):
            d = kh * WP + kw
            t = kh * K1w + kw
            p1_ref[t * C1:(t + 1) * C1, :] = xrows[:, d:d + LANES]
    acc1 = jnp.dot(w1_ref[...], p1_ref[...],
                   preferred_element_type=jnp.float32)    # (OC1, LANES)
    h_ref[:, :LANES] = jnp.maximum(acc1 + b1_ref[...], 0.0)
    h_ref[:, LANES:] = jnp.zeros((OC1, TAIL), jnp.float32)

    # ---- conv2: im2col from on-chip h, then ONE MXU dot ----
    hrows = h_ref[...]                                    # (OC1, LANES+TAIL)
    for kh in range(K2h):
        for kw in range(K2w):
            d = kh * WP + kw
            t = kh * K2w + kw
            p2_ref[t * OC1:(t + 1) * OC1, :] = hrows[:, d:d + LANES]
    acc2 = jnp.dot(w2_ref[...], p2_ref[...],
                   preferred_element_type=jnp.float32)    # (OC2, LANES)

    # Single lane-dense (multiple-of-128) store; compaction happens outside.
    out_ref[...] = (acc2 + b2_ref[...]).astype(out_ref.dtype)


def pack_params(params):
    """One-time weight repacking (hoisted out of the per-call wrapper)."""
    w1, b1, w2, b2 = params
    OC1, C1, K1h, K1w = w1.shape
    OC2, _, K2h, K2w = w2.shape
    w1m = jnp.asarray(w1, jnp.float32).transpose(0, 2, 3, 1).reshape(
        OC1, K1h * K1w * C1)                              # cols = (kh, kw, cin)
    w2m = jnp.asarray(w2, jnp.float32).transpose(0, 2, 3, 1).reshape(
        OC2, K2h * K2w * OC1)
    b1m = jnp.asarray(b1, jnp.float32).reshape(OC1, 1)
    b2m = jnp.asarray(b2, jnp.float32).reshape(OC2, 1)
    meta = dict(K1h=K1h, K1w=K1w, K2h=K2h, K2w=K2w, pad=2)
    return (w1m, b1m, w2m, b2m), meta


def cnn_forward(x, w1m, b1m, w2m, b2m, *, K1h, K1w, K2h, K2w, pad, block_b=8):
    """x: (N, 3, H, W). Returns flattened output (torch.flatten order)."""
    N, C1, H, W = x.shape
    OC1 = w1m.shape[0]
    OC2 = w2m.shape[0]
    HP, WP = H + 2 * pad, W + 2 * pad              # 11, 11
    OH1, OW1 = HP - K1h + 1, WP - K1w + 1          # 7, 7
    OH2, OW2 = OH1 - K2h + 1, OW1 - K2w + 1        # 5, 5
    L = HP * WP                                    # 121
    SLAB = 128                                     # lanes per image (aligned)
    TAIL = 128                                     # slack so tap slices stay in-bounds
    assert L <= SLAB and (K1h - 1) * WP + (K1w - 1) <= TAIL

    B = max(1, min(block_b, N))                    # images per grid step
    G = (N + B - 1) // B
    Npad = G * B
    LANES = B * SLAB

    if x.dtype != jnp.float32:
        x = x.astype(jnp.float32)
    # Zero-pad spatially, flatten spatial onto lanes, give each image a
    # 128-lane slab, pack B slabs per grid row, add a zero tail.
    xp = jnp.pad(x, ((0, Npad - N), (0, 0), (pad, pad), (pad, pad)))
    xp = xp.reshape(Npad, C1, L)
    xp = jnp.pad(xp, ((0, 0), (0, 0), (0, SLAB - L)))            # (Npad, C1, SLAB)
    xw = xp.reshape(G, B, C1, SLAB).transpose(0, 2, 1, 3).reshape(G, C1, LANES)
    xw = jnp.pad(xw, ((0, 0), (0, 0), (0, TAIL)))                # (G, C1, LANES+TAIL)

    kernel = functools.partial(
        _fused_cnn_kernel, WP=WP, K1h=K1h, K1w=K1w, K2h=K2h, K2w=K2w,
        C1=C1, OC1=OC1, LANES=LANES, TAIL=TAIL)

    flops = 2 * G * LANES * (OC1 * K1h * K1w * C1 + OC2 * K2h * K2w * OC1)
    bytes_accessed = 4 * (G * C1 * (LANES + TAIL)
                          + OC1 * (K1h * K1w * C1 + 1)
                          + OC2 * (K2h * K2w * OC1 + 1)
                          + G * OC2 * LANES)

    out = pl.pallas_call(
        kernel,
        out_shape=jax.ShapeDtypeStruct((G, OC2, LANES), jnp.float32),
        grid=(G,),
        in_specs=[
            pl.BlockSpec((None, C1, LANES + TAIL), lambda g: (g, 0, 0)),
            pl.BlockSpec((OC1, K1h * K1w * C1), lambda g: (0, 0)),
            pl.BlockSpec((OC1, 1), lambda g: (0, 0)),
            pl.BlockSpec((OC2, K2h * K2w * OC1), lambda g: (0, 0)),
            pl.BlockSpec((OC2, 1), lambda g: (0, 0)),
        ],
        out_specs=pl.BlockSpec((None, OC2, LANES), lambda g: (g, 0, 0)),
        scratch_shapes=[
            pltpu.VMEM((K1h * K1w * C1, LANES), jnp.float32),   # conv1 patches
            pltpu.VMEM((K2h * K2w * OC1, LANES), jnp.float32),  # conv2 patches
            pltpu.VMEM((OC1, LANES + TAIL), jnp.float32),       # activation h
        ],
        compiler_params=pltpu.CompilerParams(
            dimension_semantics=("parallel",)),
        cost_estimate=pl.CostEstimate(flops=flops, transcendentals=0,
                                      bytes_accessed=bytes_accessed),
    )(xw, w1m, b1m, w2m, b2m)

    # Lane-dense slab -> packed (N, OC2, OH2, OW2); pure layout plumbing.
    y = out.reshape(G, OC2, B, SLAB)[..., :L]
    y = y.reshape(G, OC2, B, HP, WP)[..., :OH2, :OW2]            # (G, OC2, B, 5, 5)
    y = y.transpose(0, 2, 1, 3, 4).reshape(Npad, OC2, OH2, OW2)[:N]
    return y.reshape(-1)                    # == torch.flatten of (N, OC2, OH2, OW2)


def _reference_forward(x, params):
    """Pure-JAX reference (lax conv) for correctness checking."""
    w1, b1, w2, b2 = params
    dn = ("NCHW", "OIHW", "NCHW")
    h = jax.lax.conv_general_dilated(x.astype(jnp.float32), w1, (1, 1),
                                     [(2, 2), (2, 2)], dimension_numbers=dn)
    h = jax.nn.relu(h + b1[None, :, None, None])
    y = jax.lax.conv_general_dilated(h, w2, (1, 1), [(0, 0), (0, 0)],
                                     dimension_numbers=dn)
    y = y + b2[None, :, None, None]
    return y.reshape(-1)


if __name__ == "__main__":
    key = jax.random.PRNGKey(0)
    kx, k1, k2, k3, k4 = jax.random.split(key, 5)

    # Module spec is torch.rand(1, 3, 7, 7); use a small batch of 8 such images
    # to exercise batch-blocking (B=4 per grid step -> 2 grid steps).
    x = jax.random.uniform(kx, (8, 3, 7, 7), dtype=jnp.float32)

    # Deterministic synthetic parameters (shapes from nn.Conv2d in __init__).
    w1 = 0.1 * jax.random.normal(k1, (4, 3, 5, 5), jnp.float32)  # Conv2d(3, 4, 5, padding=2)
    b1 = 0.1 * jax.random.normal(k2, (4,), jnp.float32)
    w2 = 0.1 * jax.random.normal(k3, (2, 4, 3, 3), jnp.float32)  # Conv2d(4, 2, 3)
    b2 = 0.1 * jax.random.normal(k4, (2,), jnp.float32)
    params = (w1, b1, w2, b2)

    (w1m, b1m, w2m, b2m), meta = pack_params(params)   # one-time repack
    fwd = jax.jit(functools.partial(cnn_forward, **meta, block_b=4))

    # Batched run (2 grid steps).
    y = fwd(x, w1m, b1m, w2m, b2m)
    jax.block_until_ready(y)
    assert y.shape == (8 * 2 * 5 * 5,), y.shape
    y_ref = _reference_forward(x, params)
    assert jnp.allclose(y, y_ref, atol=2e-4, rtol=2e-4), "mismatch vs reference (batched)"

    # Exact spec shape (1, 3, 7, 7) as well.
    x1 = x[:1]
    y1 = fwd(x1, w1m, b1m, w2m, b2m)
    jax.block_until_ready(y1)
    assert y1.shape == (50,), y1.shape
    assert jnp.allclose(y1, _reference_forward(x1, params), atol=2e-4, rtol=2e-4), \
        "mismatch vs reference (N=1)"

    print("KERNEL_OK")
</pallas_src>

<mosaic_0001>
module attributes {stable_mosaic.version = 11 : i64} {
  func.func @_fused_cnn_kernel(%arg0: i32, %arg1: memref<1x3x640xf32, #tpu.memory_space<vmem>>, %arg2: memref<4x75xf32, #tpu.memory_space<vmem>>, %arg3: memref<4x1xf32, #tpu.memory_space<vmem>>, %arg4: memref<2x36xf32, #tpu.memory_space<vmem>>, %arg5: memref<2x1xf32, #tpu.memory_space<vmem>>, %arg6: memref<1x2x512xf32, #tpu.memory_space<vmem>>, %arg7: memref<75x512xf32, #tpu.memory_space<vmem>>, %arg8: memref<36x512xf32, #tpu.memory_space<vmem>>, %arg9: memref<4x640xf32, #tpu.memory_space<vmem>>) attributes {dimension_semantics = [#tpu.dimension_semantics<parallel>], iteration_bounds = array<i64: 2>, scalar_prefetch = 0 : i64, scratch_operands = 3 : i64, tpu.core_type = #tpu.core_type<tc>, window_params = [{transform_indices = @transform_0, window_bounds = array<i64: 1, 3, 640>}, {pipeline_mode = #tpu.pipeline_mode<synchronous>, transform_indices = @transform_1, window_bounds = array<i64: 4, 75>}, {pipeline_mode = #tpu.pipeline_mode<synchronous>, transform_indices = @transform_2, window_bounds = array<i64: 4, 1>}, {pipeline_mode = #tpu.pipeline_mode<synchronous>, transform_indices = @transform_3, window_bounds = array<i64: 2, 36>}, {pipeline_mode = #tpu.pipeline_mode<synchronous>, transform_indices = @transform_4, window_bounds = array<i64: 2, 1>}, {transform_indices = @transform_5, window_bounds = array<i64: 1, 2, 512>}]} {
    %c0 = arith.constant 0 : index
    %c0_0 = arith.constant 0 : index
    %c0_1 = arith.constant 0 : index
    %0 = vector.load %arg1[%c0, %c0_0, %c0_1] : memref<1x3x640xf32, #tpu.memory_space<vmem>>, vector<1x3x640xf32>
    %1 = vector.shape_cast %0 : vector<1x3x640xf32> to vector<3x640xf32>
    %2 = vector.extract_strided_slice %1 {offsets = [0, 0], sizes = [3, 512], strides = [1, 1]} : vector<3x640xf32> to vector<3x512xf32>
    %c0_2 = arith.constant 0 : index
    %c0_3 = arith.constant 0 : index
    %3 = vector.load %arg7[%c0_2, %c0_3] : memref<75x512xf32, #tpu.memory_space<vmem>>, vector<3x512xf32>
    tpu.vector_store %arg7[%c0_2, %c0_3], %2 {strides = array<i32>} : memref<75x512xf32, #tpu.memory_space<vmem>>, vector<3x512xf32>,
    %4 = vector.extract_strided_slice %1 {offsets = [0, 1], sizes = [3, 512], strides = [1, 1]} : vector<3x640xf32> to vector<3x512xf32>
    %c3 = arith.constant 3 : index
    %c0_4 = arith.constant 0 : index
    %5 = vector.load %arg7[%c3, %c0_4] : memref<75x512xf32, #tpu.memory_space<vmem>>, vector<3x512xf32>
    tpu.vector_store %arg7[%c3, %c0_4], %4 {strides = array<i32>} : memref<75x512xf32, #tpu.memory_space<vmem>>, vector<3x512xf32>,
    %6 = vector.extract_strided_slice %1 {offsets = [0, 2], sizes = [3, 512], strides = [1, 1]} : vector<3x640xf32> to vector<3x512xf32>
    %c6 = arith.constant 6 : index
    %c0_5 = arith.constant 0 : index
    %7 = vector.load %arg7[%c6, %c0_5] : memref<75x512xf32, #tpu.memory_space<vmem>>, vector<3x512xf32>
    tpu.vector_store %arg7[%c6, %c0_5], %6 {strides = array<i32>} : memref<75x512xf32, #tpu.memory_space<vmem>>, vector<3x512xf32>,
    %8 = vector.extract_strided_slice %1 {offsets = [0, 3], sizes = [3, 512], strides = [1, 1]} : vector<3x640xf32> to vector<3x512xf32>
    %c9 = arith.constant 9 : index
    %c0_6 = arith.constant 0 : index
    %9 = vector.load %arg7[%c9, %c0_6] : memref<75x512xf32, #tpu.memory_space<vmem>>, vector<3x512xf32>
    tpu.vector_store %arg7[%c9, %c0_6], %8 {strides = array<i32>} : memref<75x512xf32, #tpu.memory_space<vmem>>, vector<3x512xf32>,
    %10 = vector.extract_strided_slice %1 {offsets = [0, 4], sizes = [3, 512], strides = [1, 1]} : vector<3x640xf32> to vector<3x512xf32>
    %c12 = arith.constant 12 : index
    %c0_7 = arith.constant 0 : index
    %11 = vector.load %arg7[%c12, %c0_7] : memref<75x512xf32, #tpu.memory_space<vmem>>, vector<3x512xf32>
    tpu.vector_store %arg7[%c12, %c0_7], %10 {strides = array<i32>} : memref<75x512xf32, #tpu.memory_space<vmem>>, vector<3x512xf32>,
    %12 = vector.extract_strided_slice %1 {offsets = [0, 11], sizes = [3, 512], strides = [1, 1]} : vector<3x640xf32> to vector<3x512xf32>
    %c15 = arith.constant 15 : index
    %c0_8 = arith.constant 0 : index
    %13 = vector.load %arg7[%c15, %c0_8] : memref<75x512xf32, #tpu.memory_space<vmem>>, vector<3x512xf32>
    tpu.vector_store %arg7[%c15, %c0_8], %12 {strides = array<i32>} : memref<75x512xf32, #tpu.memory_space<vmem>>, vector<3x512xf32>,
    %14 = vector.extract_strided_slice %1 {offsets = [0, 12], sizes = [3, 512], strides = [1, 1]} : vector<3x640xf32> to vector<3x512xf32>
    %c18 = arith.constant 18 : index
    %c0_9 = arith.constant 0 : index
    %15 = vector.load %arg7[%c18, %c0_9] : memref<75x512xf32, #tpu.memory_space<vmem>>, vector<3x512xf32>
    tpu.vector_store %arg7[%c18, %c0_9], %14 {strides = array<i32>} : memref<75x512xf32, #tpu.memory_space<vmem>>, vector<3x512xf32>,
    %16 = vector.extract_strided_slice %1 {offsets = [0, 13], sizes = [3, 512], strides = [1, 1]} : vector<3x640xf32> to vector<3x512xf32>
    %c21 = arith.constant 21 : index
    %c0_10 = arith.constant 0 : index
    %17 = vector.load %arg7[%c21, %c0_10] : memref<75x512xf32, #tpu.memory_space<vmem>>, vector<3x512xf32>
    tpu.vector_store %arg7[%c21, %c0_10], %16 {strides = array<i32>} : memref<75x512xf32, #tpu.memory_space<vmem>>, vector<3x512xf32>,
    %18 = vector.extract_strided_slice %1 {offsets = [0, 14], sizes = [3, 512], strides = [1, 1]} : vector<3x640xf32> to vector<3x512xf32>
    %c24 = arith.constant 24 : index
    %c0_11 = arith.constant 0 : index
    %19 = vector.load %arg7[%c24, %c0_11] : memref<75x512xf32, #tpu.memory_space<vmem>>, vector<3x512xf32>
    tpu.vector_store %arg7[%c24, %c0_11], %18 {strides = array<i32>} : memref<75x512xf32, #tpu.memory_space<vmem>>, vector<3x512xf32>,
    %20 = vector.extract_strided_slice %1 {offsets = [0, 15], sizes = [3, 512], strides = [1, 1]} : vector<3x640xf32> to vector<3x512xf32>
    %c27 = arith.constant 27 : index
    %c0_12 = arith.constant 0 : index
    %21 = vector.load %arg7[%c27, %c0_12] : memref<75x512xf32, #tpu.memory_space<vmem>>, vector<3x512xf32>
    tpu.vector_store %arg7[%c27, %c0_12], %20 {strides = array<i32>} : memref<75x512xf32, #tpu.memory_space<vmem>>, vector<3x512xf32>,
    %22 = vector.extract_strided_slice %1 {offsets = [0, 22], sizes = [3, 512], strides = [1, 1]} : vector<3x640xf32> to vector<3x512xf32>
    %c30 = arith.constant 30 : index
    %c0_13 = arith.constant 0 : index
    %23 = vector.load %arg7[%c30, %c0_13] : memref<75x512xf32, #tpu.memory_space<vmem>>, vector<3x512xf32>
    tpu.vector_store %arg7[%c30, %c0_13], %22 {strides = array<i32>} : memref<75x512xf32, #tpu.memory_space<vmem>>, vector<3x512xf32>,
    %24 = vector.extract_strided_slice %1 {offsets = [0, 23], sizes = [3, 512], strides = [1, 1]} : vector<3x640xf32> to vector<3x512xf32>
    %c33 = arith.constant 33 : index
    %c0_14 = arith.constant 0 : index
    %25 = vector.load %arg7[%c33, %c0_14] : memref<75x512xf32, #tpu.memory_space<vmem>>, vector<3x512xf32>
    tpu.vector_store %arg7[%c33, %c0_14], %24 {strides = array<i32>} : memref<75x512xf32, #tpu.memory_space<vmem>>, vector<3x512xf32>,
    %26 = vector.extract_strided_slice %1 {offsets = [0, 24], sizes = [3, 512], strides = [1, 1]} : vector<3x640xf32> to vector<3x512xf32>
    %c36 = arith.constant 36 : index
    %c0_15 = arith.constant 0 : index
    %27 = vector.load %arg7[%c36, %c0_15] : memref<75x512xf32, #tpu.memory_space<vmem>>, vector<3x512xf32>
    tpu.vector_store %arg7[%c36, %c0_15], %26 {strides = array<i32>} : memref<75x512xf32, #tpu.memory_space<vmem>>, vector<3x512xf32>,
    %28 = vector.extract_strided_slice %1 {offsets = [0, 25], sizes = [3, 512], strides = [1, 1]} : vector<3x640xf32> to vector<3x512xf32>
    %c39 = arith.constant 39 : index
    %c0_16 = arith.constant 0 : index
    %29 = vector.load %arg7[%c39, %c0_16] : memref<75x512xf32, #tpu.memory_space<vmem>>, vector<3x512xf32>
    tpu.vector_store %arg7[%c39, %c0_16], %28 {strides = array<i32>} : memref<75x512xf32, #tpu.memory_space<vmem>>, vector<3x512xf32>,
    %30 = vector.extract_strided_slice %1 {offsets = [0, 26], sizes = [3, 512], strides = [1, 1]} : vector<3x640xf32> to vector<3x512xf32>
    %c42 = arith.constant 42 : index
    %c0_17 = arith.constant 0 : index
    %31 = vector.load %arg7[%c42, %c0_17] : memref<75x512xf32, #tpu.memory_space<vmem>>, vector<3x512xf32>
    tpu.vector_store %arg7[%c42, %c0_17], %30 {strides = array<i32>} : memref<75x512xf32, #tpu.memory_space<vmem>>, vector<3x512xf32>,
    %32 = vector.extract_strided_slice %1 {offsets = [0, 33], sizes = [3, 512], strides = [1, 1]} : vector<3x640xf32> to vector<3x512xf32>
    %c45 = arith.constant 45 : index
    %c0_18 = arith.constant 0 : index
    %33 = vector.load %arg7[%c45, %c0_18] : memref<75x512xf32, #tpu.memory_space<vmem>>, vector<3x512xf32>
    tpu.vector_store %arg7[%c45, %c0_18], %32 {strides = array<i32>} : memref<75x512xf32, #tpu.memory_space<vmem>>, vector<3x512xf32>,
    %34 = vector.extract_strided_slice %1 {offsets = [0, 34], sizes = [3, 512], strides = [1, 1]} : vector<3x640xf32> to vector<3x512xf32>
    %c48 = arith.constant 48 : index
    %c0_19 = arith.constant 0 : index
    %35 = vector.load %arg7[%c48, %c0_19] : memref<75x512xf32, #tpu.memory_space<vmem>>, vector<3x512xf32>
    tpu.vector_store %arg7[%c48, %c0_19], %34 {strides = array<i32>} : memref<75x512xf32, #tpu.memory_space<vmem>>, vector<3x512xf32>,
    %36 = vector.extract_strided_slice %1 {offsets = [0, 35], sizes = [3, 512], strides = [1, 1]} : vector<3x640xf32> to vector<3x512xf32>
    %c51 = arith.constant 51 : index
    %c0_20 = arith.constant 0 : index
    %37 = vector.load %arg7[%c51, %c0_20] : memref<75x512xf32, #tpu.memory_space<vmem>>, vector<3x512xf32>
    tpu.vector_store %arg7[%c51, %c0_20], %36 {strides = array<i32>} : memref<75x512xf32, #tpu.memory_space<vmem>>, vector<3x512xf32>,
    %38 = vector.extract_strided_slice %1 {offsets = [0, 36], sizes = [3, 512], strides = [1, 1]} : vector<3x640xf32> to vector<3x512xf32>
    %c54 = arith.constant 54 : index
    %c0_21 = arith.constant 0 : index
    %39 = vector.load %arg7[%c54, %c0_21] : memref<75x512xf32, #tpu.memory_space<vmem>>, vector<3x512xf32>
    tpu.vector_store %arg7[%c54, %c0_21], %38 {strides = array<i32>} : memref<75x512xf32, #tpu.memory_space<vmem>>, vector<3x512xf32>,
    %40 = vector.extract_strided_slice %1 {offsets = [0, 37], sizes = [3, 512], strides = [1, 1]} : vector<3x640xf32> to vector<3x512xf32>
    %c57 = arith.constant 57 : index
    %c0_22 = arith.constant 0 : index
    %41 = vector.load %arg7[%c57, %c0_22] : memref<75x512xf32, #tpu.memory_space<vmem>>, vector<3x512xf32>
    tpu.vector_store %arg7[%c57, %c0_22], %40 {strides = array<i32>} : memref<75x512xf32, #tpu.memory_space<vmem>>, vector<3x512xf32>,
    %42 = vector.extract_strided_slice %1 {offsets = [0, 44], sizes = [3, 512], strides = [1, 1]} : vector<3x640xf32> to vector<3x512xf32>
    %c60 = arith.constant 60 : index
    %c0_23 = arith.constant 0 : index
    %43 = vector.load %arg7[%c60, %c0_23] : memref<75x512xf32, #tpu.memory_space<vmem>>, vector<3x512xf32>
    tpu.vector_store %arg7[%c60, %c0_23], %42 {strides = array<i32>} : memref<75x512xf32, #tpu.memory_space<vmem>>, vector<3x512xf32>,
    %44 = vector.extract_strided_slice %1 {offsets = [0, 45], sizes = [3, 512], strides = [1, 1]} : vector<3x640xf32> to vector<3x512xf32>
    %c63 = arith.constant 63 : index
    %c0_24 = arith.constant 0 : index
    %45 = vector.load %arg7[%c63, %c0_24] : memref<75x512xf32, #tpu.memory_space<vmem>>, vector<3x512xf32>
    tpu.vector_store %arg7[%c63, %c0_24], %44 {strides = array<i32>} : memref<75x512xf32, #tpu.memory_space<vmem>>, vector<3x512xf32>,
    %46 = vector.extract_strided_slice %1 {offsets = [0, 46], sizes = [3, 512], strides = [1, 1]} : vector<3x640xf32> to vector<3x512xf32>
    %c66 = arith.constant 66 : index
    %c0_25 = arith.constant 0 : index
    %47 = vector.load %arg7[%c66, %c0_25] : memref<75x512xf32, #tpu.memory_space<vmem>>, vector<3x512xf32>
    tpu.vector_store %arg7[%c66, %c0_25], %46 {strides = array<i32>} : memref<75x512xf32, #tpu.memory_space<vmem>>, vector<3x512xf32>,
    %48 = vector.extract_strided_slice %1 {offsets = [0, 47], sizes = [3, 512], strides = [1, 1]} : vector<3x640xf32> to vector<3x512xf32>
    %c69 = arith.constant 69 : index
    %c0_26 = arith.constant 0 : index
    %49 = vector.load %arg7[%c69, %c0_26] : memref<75x512xf32, #tpu.memory_space<vmem>>, vector<3x512xf32>
    tpu.vector_store %arg7[%c69, %c0_26], %48 {strides = array<i32>} : memref<75x512xf32, #tpu.memory_space<vmem>>, vector<3x512xf32>,
    %50 = vector.extract_strided_slice %1 {offsets = [0, 48], sizes = [3, 512], strides = [1, 1]} : vector<3x640xf32> to vector<3x512xf32>
    %c72 = arith.constant 72 : index
    %c0_27 = arith.constant 0 : index
    %51 = vector.load %arg7[%c72, %c0_27] : memref<75x512xf32, #tpu.memory_space<vmem>>, vector<3x512xf32>
    tpu.vector_store %arg7[%c72, %c0_27], %50 {strides = array<i32>} : memref<75x512xf32, #tpu.memory_space<vmem>>, vector<3x512xf32>,
    %c0_28 = arith.constant 0 : index
    %c0_29 = arith.constant 0 : index
    %52 = vector.load %arg2[%c0_28, %c0_29] : memref<4x75xf32, #tpu.memory_space<vmem>>, vector<4x75xf32>
    %c0_30 = arith.constant 0 : index
    %c0_31 = arith.constant 0 : index
    %53 = vector.load %arg7[%c0_30, %c0_31] : memref<75x512xf32, #tpu.memory_space<vmem>>, vector<75x512xf32>
    %cst = arith.constant dense<0.000000e+00> : vector<4x512xf32>
    %54 = tpu.matmul %52, %53, %cst {dimension_numbers = #tpu.dot_dimension_numbers<[1], [0], [0], [1], [0, 0, 1, 1], [], []>} : vector<4x75xf32>, vector<75x512xf32>, vector<4x512xf32> -> vector<4x512xf32>
    %c0_32 = arith.constant 0 : index
    %c0_33 = arith.constant 0 : index
    %55 = vector.load %arg3[%c0_32, %c0_33] : memref<4x1xf32, #tpu.memory_space<vmem>>, vector<4x1xf32>
    %56 = vector.broadcast %55 : vector<4x1xf32> to vector<4x512xf32>
    %57 = arith.addf %54, %56 : vector<4x512xf32>
    %cst_34 = arith.constant 0.000000e+00 : f32
    %58 = vector.broadcast %cst_34 : f32 to vector<4x512xf32>
    %59 = arith.maximumf %57, %58 : vector<4x512xf32>
    %c0_35 = arith.constant 0 : index
    %c0_36 = arith.constant 0 : index
    %60 = vector.load %arg9[%c0_35, %c0_36] : memref<4x640xf32, #tpu.memory_space<vmem>>, vector<4x512xf32>
    tpu.vector_store %arg9[%c0_35, %c0_36], %59 {strides = array<i32>} : memref<4x640xf32, #tpu.memory_space<vmem>>, vector<4x512xf32>,
    %cst_37 = arith.constant 0.000000e+00 : f32
    %61 = vector.broadcast %cst_37 : f32 to vector<4x128xf32>
    %c0_38 = arith.constant 0 : index
    %c512 = arith.constant 512 : index
    %62 = vector.load %arg9[%c0_38, %c512] : memref<4x640xf32, #tpu.memory_space<vmem>>, vector<4x128xf32>
    tpu.vector_store %arg9[%c0_38, %c512], %61 {strides = array<i32>} : memref<4x640xf32, #tpu.memory_space<vmem>>, vector<4x128xf32>,
    %c0_39 = arith.constant 0 : index
    %c0_40 = arith.constant 0 : index
    %63 = vector.load %arg9[%c0_39, %c0_40] : memref<4x640xf32, #tpu.memory_space<vmem>>, vector<4x640xf32>
    %64 = vector.extract_strided_slice %63 {offsets = [0, 0], sizes = [4, 512], strides = [1, 1]} : vector<4x640xf32> to vector<4x512xf32>
    %c0_41 = arith.constant 0 : index
    %c0_42 = arith.constant 0 : index
    %65 = vector.load %arg8[%c0_41, %c0_42] : memref<36x512xf32, #tpu.memory_space<vmem>>, vector<4x512xf32>
    tpu.vector_store %arg8[%c0_41, %c0_42], %64 {strides = array<i32>} : memref<36x512xf32, #tpu.memory_space<vmem>>, vector<4x512xf32>,
    %66 = vector.extract_strided_slice %63 {offsets = [0, 1], sizes = [4, 512], strides = [1, 1]} : vector<4x640xf32> to vector<4x512xf32>
    %c4 = arith.constant 4 : index
    %c0_43 = arith.constant 0 : index
    %67 = vector.load %arg8[%c4, %c0_43] : memref<36x512xf32, #tpu.memory_space<vmem>>, vector<4x512xf32>
    tpu.vector_store %arg8[%c4, %c0_43], %66 {strides = array<i32>} : memref<36x512xf32, #tpu.memory_space<vmem>>, vector<4x512xf32>,
    %68 = vector.extract_strided_slice %63 {offsets = [0, 2], sizes = [4, 512], strides = [1, 1]} : vector<4x640xf32> to vector<4x512xf32>
    %c8 = arith.constant 8 : index
    %c0_44 = arith.constant 0 : index
    %69 = vector.load %arg8[%c8, %c0_44] : memref<36x512xf32, #tpu.memory_space<vmem>>, vector<4x512xf32>
    tpu.vector_store %arg8[%c8, %c0_44], %68 {strides = array<i32>} : memref<36x512xf32, #tpu.memory_space<vmem>>, vector<4x512xf32>,
    %70 = vector.extract_strided_slice %63 {offsets = [0, 11], sizes = [4, 512], strides = [1, 1]} : vector<4x640xf32> to vector<4x512xf32>
    %c12_45 = arith.constant 12 : index
    %c0_46 = arith.constant 0 : index
    %71 = vector.load %arg8[%c12_45, %c0_46] : memref<36x512xf32, #tpu.memory_space<vmem>>, vector<4x512xf32>
    tpu.vector_store %arg8[%c12_45, %c0_46], %70 {strides = array<i32>} : memref<36x512xf32, #tpu.memory_space<vmem>>, vector<4x512xf32>,
    %72 = vector.extract_strided_slice %63 {offsets = [0, 12], sizes = [4, 512], strides = [1, 1]} : vector<4x640xf32> to vector<4x512xf32>
    %c16 = arith.constant 16 : index
    %c0_47 = arith.constant 0 : index
    %73 = vector.load %arg8[%c16, %c0_47] : memref<36x512xf32, #tpu.memory_space<vmem>>, vector<4x512xf32>
    tpu.vector_store %arg8[%c16, %c0_47], %72 {strides = array<i32>} : memref<36x512xf32, #tpu.memory_space<vmem>>, vector<4x512xf32>,
    %74 = vector.extract_strided_slice %63 {offsets = [0, 13], sizes = [4, 512], strides = [1, 1]} : vector<4x640xf32> to vector<4x512xf32>
    %c20 = arith.constant 20 : index
    %c0_48 = arith.constant 0 : index
    %75 = vector.load %arg8[%c20, %c0_48] : memref<36x512xf32, #tpu.memory_space<vmem>>, vector<4x512xf32>
    tpu.vector_store %arg8[%c20, %c0_48], %74 {strides = array<i32>} : memref<36x512xf32, #tpu.memory_space<vmem>>, vector<4x512xf32>,
    %76 = vector.extract_strided_slice %63 {offsets = [0, 22], sizes = [4, 512], strides = [1, 1]} : vector<4x640xf32> to vector<4x512xf32>
    %c24_49 = arith.constant 24 : index
    %c0_50 = arith.constant 0 : index
    %77 = vector.load %arg8[%c24_49, %c0_50] : memref<36x512xf32, #tpu.memory_space<vmem>>, vector<4x512xf32>
    tpu.vector_store %arg8[%c24_49, %c0_50], %76 {strides = array<i32>} : memref<36x512xf32, #tpu.memory_space<vmem>>, vector<4x512xf32>,
    %78 = vector.extract_strided_slice %63 {offsets = [0, 23], sizes = [4, 512], strides = [1, 1]} : vector<4x640xf32> to vector<4x512xf32>
    %c28 = arith.constant 28 : index
    %c0_51 = arith.constant 0 : index
    %79 = vector.load %arg8[%c28, %c0_51] : memref<36x512xf32, #tpu.memory_space<vmem>>, vector<4x512xf32>
    tpu.vector_store %arg8[%c28, %c0_51], %78 {strides = array<i32>} : memref<36x512xf32, #tpu.memory_space<vmem>>, vector<4x512xf32>,
    %80 = vector.extract_strided_slice %63 {offsets = [0, 24], sizes = [4, 512], strides = [1, 1]} : vector<4x640xf32> to vector<4x512xf32>
    %c32 = arith.constant 32 : index
    %c0_52 = arith.constant 0 : index
    %81 = vector.load %arg8[%c32, %c0_52] : memref<36x512xf32, #tpu.memory_space<vmem>>, vector<4x512xf32>
    tpu.vector_store %arg8[%c32, %c0_52], %80 {strides = array<i32>} : memref<36x512xf32, #tpu.memory_space<vmem>>, vector<4x512xf32>,
    %c0_53 = arith.constant 0 : index
    %c0_54 = arith.constant 0 : index
    %82 = vector.load %arg4[%c0_53, %c0_54] : memref<2x36xf32, #tpu.memory_space<vmem>>, vector<2x36xf32>
    %c0_55 = arith.constant 0 : index
    %c0_56 = arith.constant 0 : index
    %83 = vector.load %arg8[%c0_55, %c0_56] : memref<36x512xf32, #tpu.memory_space<vmem>>, vector<36x512xf32>
    %cst_57 = arith.constant dense<0.000000e+00> : vector<2x512xf32>
    %84 = tpu.matmul %82, %83, %cst_57 {dimension_numbers = #tpu.dot_dimension_numbers<[1], [0], [0], [1], [0, 0, 1, 1], [], []>} : vector<2x36xf32>, vector<36x512xf32>, vector<2x512xf32> -> vector<2x512xf32>
    %c0_58 = arith.constant 0 : index
    %c0_59 = arith.constant 0 : index
    %85 = vector.load %arg5[%c0_58, %c0_59] : memref<2x1xf32, #tpu.memory_space<vmem>>, vector<2x1xf32>
    %86 = vector.broadcast %85 : vector<2x1xf32> to vector<2x512xf32>
    %87 = arith.addf %84, %86 : vector<2x512xf32>
    %c0_60 = arith.constant 0 : index
    %c0_61 = arith.constant 0 : index
    %c0_62 = arith.constant 0 : index
    %88 = vector.load %arg6[%c0_60, %c0_61, %c0_62] : memref<1x2x512xf32, #tpu.memory_space<vmem>>, vector<1x2x512xf32>
    %89 = vector.shape_cast %88 : vector<1x2x512xf32> to vector<2x512xf32>
    %90 = vector.shape_cast %87 : vector<2x512xf32> to vector<1x2x512xf32>
    tpu.vector_store %arg6[%c0_60, %c0_61, %c0_62], %90 {strides = array<i32>} : memref<1x2x512xf32, #tpu.memory_space<vmem>>, vector<1x2x512xf32>,
    return
  }
  func.func @transform_0(%arg0: i32) -> (i32, i32, i32) {
    %c0_i32 = arith.constant 0 : i32
    %c0_i32_0 = arith.constant 0 : i32
    %c0_i32_1 = arith.constant 0 : i32
    return %arg0, %c0_i32, %c0_i32_0 : i32, i32, i32
  }
  func.func @transform_1(%arg0: i32) -> (i32, i32) {
    %c0_i32 = arith.constant 0 : i32
    %c0_i32_0 = arith.constant 0 : i32
    %c0_i32_1 = arith.constant 0 : i32
    return %c0_i32, %c0_i32_0 : i32, i32
  }
  func.func @transform_2(%arg0: i32) -> (i32, i32) {
    %c0_i32 = arith.constant 0 : i32
    %c0_i32_0 = arith.constant 0 : i32
    %c0_i32_1 = arith.constant 0 : i32
    return %c0_i32, %c0_i32_0 : i32, i32
  }
  func.func @transform_3(%arg0: i32) -> (i32, i32) {
    %c0_i32 = arith.constant 0 : i32
    %c0_i32_0 = arith.constant 0 : i32
    %c0_i32_1 = arith.constant 0 : i32
    return %c0_i32, %c0_i32_0 : i32, i32
  }
  func.func @transform_4(%arg0: i32) -> (i32, i32) {
    %c0_i32 = arith.constant 0 : i32
    %c0_i32_0 = arith.constant 0 : i32
    %c0_i32_1 = arith.constant 0 : i32
    return %c0_i32, %c0_i32_0 : i32, i32
  }
  func.func @transform_5(%arg0: i32) -> (i32, i32, i32) {
    %c0_i32 = arith.constant 0 : i32
    %c0_i32_0 = arith.constant 0 : i32
    %c0_i32_1 = arith.constant 0 : i32
    return %arg0, %c0_i32, %c0_i32_0 : i32, i32, i32
  }
}

</mosaic_0001>

<llo_original>
// kernel: cnn_forward.1
$region0: #{cnn_forward.1}
  #allocation0 [shape = 'u32[]', space=smem, size = 0x4, offset = 0x4, fixed_abs, tag = 'smem constant byte address 0x4 - core index']
  #allocation1 [shape = 'u32[144,128]{1,0:T(1,128)}', space=vmem, size = 0x12000, scoped, tag = 'internal scratch']
  #allocation2 [shape = 'f32[75,512]{1,0:T(8,128)}', space=vmem, size = 0x28000, scoped, tag = 'scratch operand']
  #allocation3 [shape = 'f32[36,512]{1,0:T(8,128)}', space=vmem, size = 0x14000, scoped, tag = 'scratch operand']
  #allocation4 [shape = 'f32[4,640]{1,0:T(4,128)}', space=vmem, size = 0x2800, scoped, tag = 'scratch operand']
  %s0 = inlined_call_operand.vmem [shape: f32[2,3,640], index: 0, kind: input, shape index: {}]
  %s1 = inlined_call_operand.vmem [shape: f32[4,75], index: 1, kind: input, shape index: {}]
  %s2 = inlined_call_operand.vmem [shape: f32[4,1], index: 2, kind: input, shape index: {}]
  %s3 = inlined_call_operand.vmem [shape: f32[2,36], index: 3, kind: input, shape index: {}]
  %s4 = inlined_call_operand.vmem [shape: f32[2,1], index: 4, kind: input, shape index: {}]
  %s5 = inlined_call_operand.vmem [shape: f32[2,2,512], index: 5, kind: output, shape index: {}]
  %s6 = sld [smem:[#allocation0]]
  $region53: #{cnn_forward.1} parent=0
    _
  %s8 = ssub.s32 1, %s6
  %s9 = scalar_select 0, %s8, %s6
  loop: start=0, step=1, limit=4
  $region2: #{cnn_forward.1} parent=0 // loop_pre_header
    _
  $region3: #{cnn_forward.1} parent=0 // loop_header
    %s11 = sphi 0, %s15
    %p12 = scmp.ge.s32.totalorder %s11, 4
    %s21 = sphi 0, %s23
    %s24 = sphi 0, %s21
    %s25 = sphi 0, %s24
    %s41 = sphi 0, %s25
    %s45 = sphi 0, %s45
    %s47 = sphi 0, %s45
    %s48 = sphi 0, %s47
    %s62 = sphi 0, %s48
    %s66 = sphi 0, %s66
    %s68 = sphi 0, %s66
    %s69 = sphi 0, %s68
    %s83 = sphi 0, %s69
    %s87 = sphi 0, %s87
    %s89 = sphi 0, %s87
    %s90 = sphi 0, %s89
    %s104 = sphi 0, %s90
    %s108 = sphi 0, %s108
    %s110 = sphi 0, %s108
    %s111 = sphi 0, %s110
    %s125 = sphi 0, %s111
    %s131 = sphi 0, %s133
    %s134 = sphi 0, %s131
    %s135 = sphi 0, %s134
    %s151 = sphi 0, %s135
  $region4: #{cnn_forward.1} parent=0 // loop_header_branch
    %14 = sbr.rel (%p12) target = $region8
  $region5: #{cnn_forward.1} parent=0 // loop_body
    %s16 = ssub.s32 %s11, 1
    %s17 = ssub.s32 %s11, 2
    %s18 = sadd.s32 %s11, 1
    %s19 = ssub.s32 %s11, %s18
    %p20 = scmp.eq.s32.totalorder %s19, 0
    %s22 = sadd.s32 %s21, 1
    %s23 = scalar_select %p20, %s21, %s22
    %p26 = pneg %p20
    %p27 = scmp.eq.s32.totalorder %s11, 1
    %p28 = por %p26, %p27
    %p29 = scmp.ne.s32.totalorder %s21, %s24
    %p30 = scmp.eq.s32.totalorder %s11, 0
    %p31 = por %p29, %p30
    %p32 = scmp.ne.s32.totalorder %s21, %s24
    %p33 = scmp.eq.s32.totalorder %s16, 1
    %p34 = por %p32, %p33
    %p35 = scmp.ne.s32.totalorder %s24, %s25
    %p36 = scmp.eq.s32.totalorder %s16, 0
    %p37 = por %p35, %p36
    %p38 = scmp.ne.s32.totalorder %s24, %s25
    %p39 = scmp.eq.s32.totalorder %s17, 1
    %p40 = por %p38, %p39
    %p42 = scmp.ne.s32.totalorder %s25, %s41
    %p43 = scmp.eq.s32.totalorder %s17, 0
    %p44 = por %p42, %p43
    %s46 = sadd.s32 %s45, 1
    %p49 = scmp.eq.s32.totalorder %s11, 1
    %p50 = scmp.ne.s32.totalorder %s45, %s47
    %p51 = scmp.eq.s32.totalorder %s11, 0
    %p52 = por %p50, %p51
    %p53 = scmp.ne.s32.totalorder %s45, %s47
    %p54 = scmp.eq.s32.totalorder %s16, 1
    %p55 = por %p53, %p54
    %p56 = scmp.ne.s32.totalorder %s47, %s48
    %p57 = scmp.eq.s32.totalorder %s16, 0
    %p58 = por %p56, %p57
    %p59 = scmp.ne.s32.totalorder %s47, %s48
    %p60 = scmp.eq.s32.totalorder %s17, 1
    %p61 = por %p59, %p60
    %p63 = scmp.ne.s32.totalorder %s48, %s62
    %p64 = scmp.eq.s32.totalorder %s17, 0
    %p65 = por %p63, %p64
    %s67 = sadd.s32 %s66, 1
    %p70 = scmp.eq.s32.totalorder %s11, 1
    %p71 = scmp.ne.s32.totalorder %s66, %s68
    %p72 = scmp.eq.s32.totalorder %s11, 0
    %p73 = por %p71, %p72
    %p74 = scmp.ne.s32.totalorder %s66, %s68
    %p75 = scmp.eq.s32.totalorder %s16, 1
    %p76 = por %p74, %p75
    %p77 = scmp.ne.s32.totalorder %s68, %s69
    %p78 = scmp.eq.s32.totalorder %s16, 0
    %p79 = por %p77, %p78
    %p80 = scmp.ne.s32.totalorder %s68, %s69
    %p81 = scmp.eq.s32.totalorder %s17, 1
    %p82 = por %p80, %p81
    %p84 = scmp.ne.s32.totalorder %s69, %s83
    %p85 = scmp.eq.s32.totalorder %s17, 0
    %p86 = por %p84, %p85
    %s88 = sadd.s32 %s87, 1
    %p91 = scmp.eq.s32.totalorder %s11, 1
    %p92 = scmp.ne.s32.totalorder %s87, %s89
    %p93 = scmp.eq.s32.totalorder %s11, 0
    %p94 = por %p92, %p93
    %p95 = scmp.ne.s32.totalorder %s87, %s89
    %p96 = scmp.eq.s32.totalorder %s16, 1
    %p97 = por %p95, %p96
    %p98 = scmp.ne.s32.totalorder %s89, %s90
    %p99 = scmp.eq.s32.totalorder %s16, 0
    %p100 = por %p98, %p99
    %p101 = scmp.ne.s32.totalorder %s89, %s90
    %p102 = scmp.eq.s32.totalorder %s17, 1
    %p103 = por %p101, %p102
    %p105 = scmp.ne.s32.totalorder %s90, %s104
    %p106 = scmp.eq.s32.totalorder %s17, 0
    %p107 = por %p105, %p106
    %s109 = sadd.s32 %s108, 1
    %p112 = scmp.eq.s32.totalorder %s11, 1
    %p113 = scmp.ne.s32.totalorder %s108, %s110
    %p114 = scmp.eq.s32.totalorder %s11, 0
    %p115 = por %p113, %p114
    %p116 = scmp.ne.s32.totalorder %s108, %s110
    %p117 = scmp.eq.s32.totalorder %s16, 1
    %p118 = por %p116, %p117
    %p119 = scmp.ne.s32.totalorder %s110, %s111
    %p120 = scmp.eq.s32.totalorder %s16, 0
    %p121 = por %p119, %p120
    %p122 = scmp.ne.s32.totalorder %s110, %s111
    %p123 = scmp.eq.s32.totalorder %s17, 1
    %p124 = por %p122, %p123
    %p126 = scmp.ne.s32.totalorder %s111, %s125
    %p127 = scmp.eq.s32.totalorder %s17, 0
    %p128 = por %p126, %p127
    %s129 = ssub.s32 %s11, %s18
    %p130 = scmp.eq.s32.totalorder %s129, 0
    %s132 = sadd.s32 %s131, 1
    %s133 = scalar_select %p130, %s131, %s132
    %p136 = pneg %p130
    %p137 = scmp.eq.s32.totalorder %s11, 1
    %p138 = por %p136, %p137
    %p139 = scmp.ne.s32.totalorder %s131, %s134
    %p140 = scmp.eq.s32.totalorder %s11, 0
    %p141 = por %p139, %p140
    %p142 = scmp.ne.s32.totalorder %s131, %s134
    %p143 = scmp.eq.s32.totalorder %s16, 1
    %p144 = por %p142, %p143
    %p145 = scmp.ne.s32.totalorder %s134, %s135
    %p146 = scmp.eq.s32.totalorder %s16, 0
    %p147 = por %p145, %p146
    %p148 = scmp.ne.s32.totalorder %s134, %s135
    %p149 = scmp.eq.s32.totalorder %s17, 1
    %p150 = por %p148, %p149
    %p152 = scmp.ne.s32.totalorder %s135, %s151
    %p153 = scmp.eq.s32.totalorder %s17, 0
    %p154 = por %p152, %p153
    %p155 = scmp.le.s32.totalorder 1, %s11
    %p156 = scmp.lt.s32.totalorder %s11, 3
    %p157 = pnand %p155, %p156
    %p158 = pneg %p157
    // Predicated region
    $region9: #{cnn_forward.1} parent=5 // pred_check
      _
    $region10: #{cnn_forward.1} parent=5 // pred_check_branch
      %160 = sbr.rel (%p157) target = $region12
    $region11: #{cnn_forward.1} parent=5 // pred_region
      %s161 = ssub.s32 %s11, 1
      // Predicated region
      $region13: #{cnn_forward.1} parent=11 // pred_check
        %p162 = pneg %p58
      $region14: #{cnn_forward.1} parent=11 // pred_check_branch
        %164 = sbr.rel (%p162) target = $region16
      $region15: #{cnn_forward.1} parent=11 // pred_region
        _
      $region16: #{cnn_forward.1} parent=11 // pred_fallthru
        _
      // Predicated region
      $region17: #{cnn_forward.1} parent=11 // pred_check
        %p165 = pneg %p79
      $region18: #{cnn_forward.1} parent=11 // pred_check_branch
        %167 = sbr.rel (%p165) target = $region20
      $region19: #{cnn_forward.1} parent=11 // pred_region
        _
      $region20: #{cnn_forward.1} parent=11 // pred_fallthru
        _
      // Predicated region
      $region21: #{cnn_forward.1} parent=11 // pred_check
        %p168 = pneg %p100
      $region22: #{cnn_forward.1} parent=11 // pred_check_branch
        %170 = sbr.rel (%p168) target = $region24
      $region23: #{cnn_forward.1} parent=11 // pred_region
        _
      $region24: #{cnn_forward.1} parent=11 // pred_fallthru
        _
      // Predicated region
      $region25: #{cnn_forward.1} parent=11 // pred_check
        %p171 = pneg %p121
      $region26: #{cnn_forward.1} parent=11 // pred_check_branch
        %173 = sbr.rel (%p171) target = $region28
      $region27: #{cnn_forward.1} parent=11 // pred_region
        _
      $region28: #{cnn_forward.1} parent=11 // pred_fallthru
        _
    $region12: #{cnn_forward.1} parent=5 // pred_fallthru
      _
    %p174 = scmp.lt.s32.totalorder %s11, 2
    // Predicated region
    $region29: #{cnn_forward.1} parent=5 // pred_check
      %p175 = pneg %p174
    $region30: #{cnn_forward.1} parent=5 // pred_check_branch
      %177 = sbr.rel (%p175) target = $region32
    $region31: #{cnn_forward.1} parent=5 // pred_region
      // Predicated region
      $region33: #{cnn_forward.1} parent=31 // pred_check
        %p178 = pneg %p31
      $region34: #{cnn_forward.1} parent=31 // pred_check_branch
        %180 = sbr.rel (%p178) target = $region36
      $region35: #{cnn_forward.1} parent=31 // pred_region
        %p181 = scmp.lt.s32.totalorder %s11, 1
        %s182 = scalar_select %p181, %s11, 1
        %s183 = smul.addr %s182, 5
        %s184 = smul.addr %s183, 4
        %s185 = scalar_lea.vmem %s0, %s184
      $region36: #{cnn_forward.1} parent=31 // pred_fallthru
        _
    $region32: #{cnn_forward.1} parent=5 // pred_fallthru
      _
    %p186 = scmp.le.s32.totalorder 1, %s11
    %p187 = scmp.lt.s32.totalorder %s11, 3
    %p188 = pnand %p186, %p187
    %p189 = pneg %p188
    // Predicated region
    $region37: #{cnn_forward.1} parent=5 // pred_check
      _
    $region38: #{cnn_forward.1} parent=5 // pred_check_branch
      %191 = sbr.rel (%p188) target = $region40
    $region39: #{cnn_forward.1} parent=5 // pred_region
      %s192 = ssub.s32 %s11, 1
      %p193 = scmp.lt.s32.totalorder %s16, 1
      %s194 = scalar_select %p193, %s16, 1
      %s195 = smul.addr %s194, 5
      %s196 = smul.addr %s195, 4
      %s197 = scalar_lea.vmem %s0, %s196
      %p198 = pneg %p37
      %p199 = pneg %p34
      %p200 = pneg %p58
      %p201 = pneg %p55
      %p202 = pneg %p79
      %p203 = pneg %p76
      %p204 = pneg %p100
      %p205 = pneg %p97
      %p206 = pneg %p121
      %p207 = pneg %p118
      %p208 = pneg %p147
      %p209 = pneg %p144
      %p210 = scmp.lt.s32.totalorder %s16, 1
      %s211 = scalar_select %p210, %s16, 1
      %s212 = smul.addr %s211, 4
      %s213 = smul.addr %s212, 2
      %s214 = scalar_lea.vmem %s5, %s213
      %p215 = scmp.lt.s32.totalorder %s16, 1
      %s216 = scalar_select %p215, %s16, 1
      %s217 = smul.addr %s216, 5
      %s218 = smul.addr %s217, 4
      %s219 = scalar_lea.vmem %s0, %s218
      %p220 = scmp.lt.s32.totalorder %s16, 1
      %s221 = scalar_select %p220, %s16, 1
      %s222 = smul.addr %s221, 4
      %s223 = smul.addr %s222, 2
      %s224 = scalar_lea.vmem %s5, %s223
      %v225 = vld [vmem:[%s219] sm:$0x77]
      %v226 = vld [vmem:[%s219 + $0x8] sm:$0x77]
      %v227 = vld [vmem:[%s219 + $0x10] sm:$0x7]
      %v230 = vcombine.high %v225, %v225
      %v231 = vcombine.high %v226, %v226
      %234 = vst [vmem:[#allocation2] sm:$0x7] %v225
      %235 = vst [vmem:[#allocation2 + $0x8] sm:$0x7] %v230
      %236 = vst [vmem:[#allocation2 + $0x10] sm:$0x7] %v226
      %237 = vst [vmem:[#allocation2 + $0x18] sm:$0x7] %v231
      %v239 = vrot.slane %v225, 5
      %v240 = vrot.slane %v230, 5
      %v241 = vrot.slane %v226, 5
      %v242 = vrot.slane %v231, 5
      %v243 = vrot.slane %v227, 5
      %244 = vrot.lane.b32.xlu0 %v239, 127
      %v245 = vpop.permute.xlu0 %244
      %246 = vrot.lane.b32.xlu0 %v240, 127
      %v247 = vpop.permute.xlu0 %246
      %248 = vrot.lane.b32.xlu0 %v241, 127
      %v249 = vpop.permute.xlu0 %248
      %250 = vrot.lane.b32.xlu0 %v242, 127
      %v251 = vpop.permute.xlu0 %250
      %252 = vrot.lane.b32.xlu0 %v243, 127
      %v253 = vpop.permute.xlu0 %252
      %vm254 = vcmask 1039360
      %v255 = vsel %vm254, %v245, %v247
      %v256 = vsel %vm254, %v247, %v249
      %v257 = vsel %vm254, %v249, %v251
      %v258 = vsel %vm254, %v251, %v253
      %263 = vst [vmem:[#allocation2] sm:$0x38] %v255
      %264 = vst [vmem:[#allocation2 + $0x8] sm:$0x38] %v256
      %265 = vst [vmem:[#allocation2 + $0x10] sm:$0x38] %v257
      %266 = vst [vmem:[#allocation2 + $0x18] sm:$0x38] %v258
      %v267 = vrot.slane %v225, 2
      %v268 = vrot.slane %v230, 2
      %v269 = vrot.slane %v226, 2
      %v270 = vrot.slane %v231, 2
      %v271 = vrot.slane %v227, 2
      %272 = vrot.lane.b32.xlu0 %v267, 126
      %v273 = vpop.permute.xlu0 %272
      %274 = vrot.lane.b32.xlu0 %v268, 126
      %v275 = vpop.permute.xlu0 %274
      %276 = vrot.lane.b32.xlu0 %v269, 126
      %v277 = vpop.permute.xlu0 %276
      %278 = vrot.lane.b32.xlu0 %v270, 126
      %v279 = vpop.permute.xlu0 %278
      %280 = vrot.lane.b32.xlu0 %v271, 126
      %v281 = vpop.permute.xlu0 %280
      %vm282 = vcmask 1031168
      %v283 = vsel %vm282, %v273, %v275
      %v284 = vsel %vm282, %v275, %v277
      %v285 = vsel %vm282, %v277, %v279
      %v286 = vsel %vm282, %v279, %v281
      %291 = vst [vmem:[#allocation2] sm:$0xc0] %v283
      %292 = vst [vmem:[#allocation2 + $0x8] sm:$0xc0] %v284
      %293 = vst [vmem:[#allocation2 + $0x10] sm:$0xc0] %v285
      %294 = vst [vmem:[#allocation2 + $0x18] sm:$0xc0] %v286
      %295 = vst [vmem:[#allocation2 + $0x20] sm:$0x1] %v283
      %296 = vst [vmem:[#allocation2 + $0x28] sm:$0x1] %v284
      %297 = vst [vmem:[#allocation2 + $0x30] sm:$0x1] %v285
      %298 = vst [vmem:[#allocation2 + $0x38] sm:$0x1] %v286
      %v299 = vrot.slane %v225, 7
      %v300 = vrot.slane %v230, 7
      %v301 = vrot.slane %v226, 7
      %v302 = vrot.slane %v231, 7
      %v303 = vrot.slane %v227, 7
      %304 = vrot.lane.b32.xlu0 %v299, 125
      %v305 = vpop.permute.xlu0 %304
      %306 = vrot.lane.b32.xlu0 %v300, 125
      %v307 = vpop.permute.xlu0 %306
      %308 = vrot.lane.b32.xlu0 %v301, 125
      %v309 = vpop.permute.xlu0 %308
      %310 = vrot.lane.b32.xlu0 %v302, 125
      %v311 = vpop.permute.xlu0 %310
      %312 = vrot.lane.b32.xlu0 %v303, 125
      %v313 = vpop.permute.xlu0 %312
      %vm314 = vcmask 1022976
      %v315 = vsel %vm314, %v305, %v307
      %v316 = vsel %vm314, %v307, %v309
      %v317 = vsel %vm314, %v309, %v311
      %v318 = vsel %vm314, %v311, %v313
      %323 = vst [vmem:[#allocation2 + $0x20] sm:$0xe] %v315
      %324 = vst [vmem:[#allocation2 + $0x28] sm:$0xe] %v316
      %325 = vst [vmem:[#allocation2 + $0x30] sm:$0xe] %v317
      %326 = vst [vmem:[#allocation2 + $0x38] sm:$0xe] %v318
      %v327 = vcombine.low %v225, %v225
      %v328 = vcombine.low %v226, %v226
      %v329 = vcombine.low %v227, %v227
      %330 = vrot.lane.b32.xlu0 %v327, 124
      %v331 = vpop.permute.xlu0 %330
      %332 = vrot.lane.b32.xlu0 %v225, 124
      %v333 = vpop.permute.xlu0 %332
      %334 = vrot.lane.b32.xlu0 %v328, 124
      %v335 = vpop.permute.xlu0 %334
      %336 = vrot.lane.b32.xlu0 %v226, 124
      %v337 = vpop.permute.xlu0 %336
      %338 = vrot.lane.b32.xlu0 %v329, 124
      %v339 = vpop.permute.xlu0 %338
      %vm340 = vcmask 1014784
      %v341 = vsel %vm340, %v331, %v333
      %v342 = vsel %vm340, %v333, %v335
      %v343 = vsel %vm340, %v335, %v337
      %v344 = vsel %vm340, %v337, %v339
      %349 = vst [vmem:[#allocation2 + $0x20] sm:$0x70] %v341
      %350 = vst [vmem:[#allocation2 + $0x28] sm:$0x70] %v342
      %351 = vst [vmem:[#allocation2 + $0x30] sm:$0x70] %v343
      %352 = vst [vmem:[#allocation2 + $0x38] sm:$0x70] %v344
      %v353 = vrot.slane %v225, 1
      %v354 = vrot.slane %v230, 1
      %v355 = vrot.slane %v226, 1
      %v356 = vrot.slane %v231, 1
      %v357 = vrot.slane %v227, 1
      %358 = vrot.lane.b32.xlu0 %v353, 117
      %v359 = vpop.permute.xlu0 %358
      %360 = vrot.lane.b32.xlu0 %v354, 117
      %v361 = vpop.permute.xlu0 %360
      %362 = vrot.lane.b32.xlu0 %v355, 117
      %v363 = vpop.permute.xlu0 %362
      %364 = vrot.lane.b32.xlu0 %v356, 117
      %v365 = vpop.permute.xlu0 %364
      %366 = vrot.lane.b32.xlu0 %v357, 117
      %v367 = vpop.permute.xlu0 %366
      %vm368 = vcmask 957440
      %v369 = vsel %vm368, %v359, %v361
      %v370 = vsel %vm368, %v361, %v363
      %v371 = vsel %vm368, %v363, %v365
      %v372 = vsel %vm368, %v365, %v367
      %377 = vst [vmem:[#allocation2 + $0x20] sm:$0x80] %v369
      %378 = vst [vmem:[#allocation2 + $0x28] sm:$0x80] %v370
      %379 = vst [vmem:[#allocation2 + $0x30] sm:$0x80] %v371
      %380 = vst [vmem:[#allocation2 + $0x38] sm:$0x80] %v372
      %381 = vst [vmem:[#allocation2 + $0x40] sm:$0x3] %v369
      %382 = vst [vmem:[#allocation2 + $0x48] sm:$0x3] %v370
      %383 = vst [vmem:[#allocation2 + $0x50] sm:$0x3] %v371
      %384 = vst [vmem:[#allocation2 + $0x58] sm:$0x3] %v372
      %v385 = vrot.slane %v225, 6
      %v386 = vrot.slane %v230, 6
      %v387 = vrot.slane %v226, 6
      %v388 = vrot.slane %v231, 6
      %v389 = vrot.slane %v227, 6
      %390 = vrot.lane.b32.xlu0 %v385, 116
      %v391 = vpop.permute.xlu0 %390
      %392 = vrot.lane.b32.xlu0 %v386, 116
      %v393 = vpop.permute.xlu0 %392
      %394 = vrot.lane.b32.xlu0 %v387, 116
      %v395 = vpop.permute.xlu0 %394
      %396 = vrot.lane.b32.xlu0 %v388, 116
      %v397 = vpop.permute.xlu0 %396
      %398 = vrot.lane.b32.xlu0 %v389, 116
      %v399 = vpop.permute.xlu0 %398
      %vm400 = vcmask 949248
      %v401 = vsel %vm400, %v391, %v393
      %v402 = vsel %vm400, %v393, %v395
      %v403 = vsel %vm400, %v395, %v397
      %v404 = vsel %vm400, %v397, %v399
      %409 = vst [vmem:[#allocation2 + $0x40] sm:$0x1c] %v401
      %410 = vst [vmem:[#allocation2 + $0x48] sm:$0x1c] %v402
      %411 = vst [vmem:[#allocation2 + $0x50] sm:$0x1c] %v403
      %412 = vst [vmem:[#allocation2 + $0x58] sm:$0x1c] %v404
      %v413 = vrot.slane %v225, 3
      %v414 = vrot.slane %v230, 3
      %v415 = vrot.slane %v226, 3
      %v416 = vrot.slane %v231, 3
      %v417 = vrot.slane %v227, 3
      %418 = vrot.lane.b32.xlu0 %v413, 115
      %v419 = vpop.permute.xlu0 %418
      %420 = vrot.lane.b32.xlu0 %v414, 115
      %v421 = vpop.permute.xlu0 %420
      %422 = vrot.lane.b32.xlu0 %v415, 115
      %v423 = vpop.permute.xlu0 %422
      %424 = vrot.lane.b32.xlu0 %v416, 115
      %v425 = vpop.permute.xlu0 %424
      %426 = vrot.lane.b32.xlu0 %v417, 115
      %v427 = vpop.permute.xlu0 %426
      %vm428 = vcmask 941056
      %v429 = vsel %vm428, %v419, %v421
      %v430 = vsel %vm428, %v421, %v423
      %v431 = vsel %vm428, %v423, %v425
      %v432 = vsel %vm428, %v425, %v427
      %437 = vst [vmem:[#allocation2 + $0x40] sm:$0xe0] %v429
      %438 = vst [vmem:[#allocation2 + $0x48] sm:$0xe0] %v430
      %439 = vst [vmem:[#allocation2 + $0x50] sm:$0xe0] %v431
      %440 = vst [vmem:[#allocation2 + $0x58] sm:$0xe0] %v432
      %441 = vrot.lane.b32.xlu0 %v225, 114
      %v442 = vpop.permute.xlu0 %441
      %443 = vrot.lane.b32.xlu0 %v230, 114
      %v444 = vpop.permute.xlu0 %443
      %445 = vrot.lane.b32.xlu0 %v226, 114
      %v446 = vpop.permute.xlu0 %445
      %447 = vrot.lane.b32.xlu0 %v231, 114
      %v448 = vpop.permute.xlu0 %447
      %449 = vrot.lane.b32.xlu0 %v227, 114
      %v450 = vpop.permute.xlu0 %449
      %vm451 = vcmask 932864
      %v452 = vsel %vm451, %v442, %v444
      %v453 = vsel %vm451, %v444, %v446
      %v454 = vsel %vm451, %v446, %v448
      %v455 = vsel %vm451, %v448, %v450
      %460 = vst [vmem:[#allocation2 + $0x60] sm:$0x7] %v452
      %461 = vst [vmem:[#allocation2 + $0x68] sm:$0x7] %v453
      %462 = vst [vmem:[#allocation2 + $0x70] sm:$0x7] %v454
      %463 = vst [vmem:[#allocation2 + $0x78] sm:$0x7] %v455
      %464 = vrot.lane.b32.xlu0 %v239, 113
      %v465 = vpop.permute.xlu0 %464
      %466 = vrot.lane.b32.xlu0 %v240, 113
      %v467 = vpop.permute.xlu0 %466
      %468 = vrot.lane.b32.xlu0 %v241, 113
      %v469 = vpop.permute.xlu0 %468
      %470 = vrot.lane.b32.xlu0 %v242, 113
      %v471 = vpop.permute.xlu0 %470
      %472 = vrot.lane.b32.xlu0 %v243, 113
      %v473 = vpop.permute.xlu0 %472
      %vm474 = vcmask 924672
      %v475 = vsel %vm474, %v465, %v467
      %v476 = vsel %vm474, %v467, %v469
      %v477 = vsel %vm474, %v469, %v471
      %v478 = vsel %vm474, %v471, %v473
      %483 = vst [vmem:[#allocation2 + $0x60] sm:$0x38] %v475
      %484 = vst [vmem:[#allocation2 + $0x68] sm:$0x38] %v476
      %485 = vst [vmem:[#allocation2 + $0x70] sm:$0x38] %v477
      %486 = vst [vmem:[#allocation2 + $0x78] sm:$0x38] %v478
      %487 = vrot.lane.b32.xlu0 %v267, 106
      %v488 = vpop.permute.xlu0 %487
      %489 = vrot.lane.b32.xlu0 %v268, 106
      %v490 = vpop.permute.xlu0 %489
      %491 = vrot.lane.b32.xlu0 %v269, 106
      %v492 = vpop.permute.xlu0 %491
      %493 = vrot.lane.b32.xlu0 %v270, 106
      %v494 = vpop.permute.xlu0 %493
      %495 = vrot.lane.b32.xlu0 %v271, 106
      %v496 = vpop.permute.xlu0 %495
      %vm497 = vcmask 867328
      %v498 = vsel %vm497, %v488, %v490
      %v499 = vsel %vm497, %v490, %v492
      %v500 = vsel %vm497, %v492, %v494
      %v501 = vsel %vm497, %v494, %v496
      %506 = vst [vmem:[#allocation2 + $0x60] sm:$0xc0] %v498
      %507 = vst [vmem:[#allocation2 + $0x68] sm:$0xc0] %v499
      %508 = vst [vmem:[#allocation2 + $0x70] sm:$0xc0] %v500
      %509 = vst [vmem:[#allocation2 + $0x78] sm:$0xc0] %v501
      %510 = vst [vmem:[#allocation2 + $0x80] sm:$0x1] %v498
      %511 = vst [vmem:[#allocation2 + $0x88] sm:$0x1] %v499
      %512 = vst [vmem:[#allocation2 + $0x90] sm:$0x1] %v500
      %513 = vst [vmem:[#allocation2 + $0x98] sm:$0x1] %v501
      %514 = vrot.lane.b32.xlu0 %v299, 105
      %v515 = vpop.permute.xlu0 %514
      %516 = vrot.lane.b32.xlu0 %v300, 105
      %v517 = vpop.permute.xlu0 %516
      %518 = vrot.lane.b32.xlu0 %v301, 105
      %v519 = vpop.permute.xlu0 %518
      %520 = vrot.lane.b32.xlu0 %v302, 105
      %v521 = vpop.permute.xlu0 %520
      %522 = vrot.lane.b32.xlu0 %v303, 105
      %v523 = vpop.permute.xlu0 %522
      %vm524 = vcmask 859136
      %v525 = vsel %vm524, %v515, %v517
      %v526 = vsel %vm524, %v517, %v519
      %v527 = vsel %vm524, %v519, %v521
      %v528 = vsel %vm524, %v521, %v523
      %533 = vst [vmem:[#allocation2 + $0x80] sm:$0xe] %v525
      %534 = vst [vmem:[#allocation2 + $0x88] sm:$0xe] %v526
      %535 = vst [vmem:[#allocation2 + $0x90] sm:$0xe] %v527
      %536 = vst [vmem:[#allocation2 + $0x98] sm:$0xe] %v528
      %537 = vrot.lane.b32.xlu0 %v327, 104
      %v538 = vpop.permute.xlu0 %537
      %539 = vrot.lane.b32.xlu0 %v225, 104
      %v540 = vpop.permute.xlu0 %539
      %541 = vrot.lane.b32.xlu0 %v328, 104
      %v542 = vpop.permute.xlu0 %541
      %543 = vrot.lane.b32.xlu0 %v226, 104
      %v544 = vpop.permute.xlu0 %543
      %545 = vrot.lane.b32.xlu0 %v329, 104
      %v546 = vpop.permute.xlu0 %545
      %vm547 = vcmask 850944
      %v548 = vsel %vm547, %v538, %v540
      %v549 = vsel %vm547, %v540, %v542
      %v550 = vsel %vm547, %v542, %v544
      %v551 = vsel %vm547, %v544, %v546
      %556 = vst [vmem:[#allocation2 + $0x80] sm:$0x70] %v548
      %557 = vst [vmem:[#allocation2 + $0x88] sm:$0x70] %v549
      %558 = vst [vmem:[#allocation2 + $0x90] sm:$0x70] %v550
      %559 = vst [vmem:[#allocation2 + $0x98] sm:$0x70] %v551
      %560 = vrot.lane.b32.xlu0 %v353, 103
      %v561 = vpop.permute.xlu0 %560
      %562 = vrot.lane.b32.xlu0 %v354, 103
      %v563 = vpop.permute.xlu0 %562
      %564 = vrot.lane.b32.xlu0 %v355, 103
      %v565 = vpop.permute.xlu0 %564
      %566 = vrot.lane.b32.xlu0 %v356, 103
      %v567 = vpop.permute.xlu0 %566
      %568 = vrot.lane.b32.xlu0 %v357, 103
      %v569 = vpop.permute.xlu0 %568
      %vm570 = vcmask 842752
      %v571 = vsel %vm570, %v561, %v563
      %v572 = vsel %vm570, %v563, %v565
      %v573 = vsel %vm570, %v565, %v567
      %v574 = vsel %vm570, %v567, %v569
      %579 = vst [vmem:[#allocation2 + $0x80] sm:$0x80] %v571
      %580 = vst [vmem:[#allocation2 + $0x88] sm:$0x80] %v572
      %581 = vst [vmem:[#allocation2 + $0x90] sm:$0x80] %v573
      %582 = vst [vmem:[#allocation2 + $0x98] sm:$0x80] %v574
      %583 = vst [vmem:[#allocation2 + $0xa0] sm:$0x3] %v571
      %584 = vst [vmem:[#allocation2 + $0xa8] sm:$0x3] %v572
      %585 = vst [vmem:[#allocation2 + $0xb0] sm:$0x3] %v573
      %586 = vst [vmem:[#allocation2 + $0xb8] sm:$0x3] %v574
      %587 = vrot.lane.b32.xlu0 %v385, 102
      %v588 = vpop.permute.xlu0 %587
      %589 = vrot.lane.b32.xlu0 %v386, 102
      %v590 = vpop.permute.xlu0 %589
      %591 = vrot.lane.b32.xlu0 %v387, 102
      %v592 = vpop.permute.xlu0 %591
      %593 = vrot.lane.b32.xlu0 %v388, 102
      %v594 = vpop.permute.xlu0 %593
      %595 = vrot.lane.b32.xlu0 %v389, 102
      %v596 = vpop.permute.xlu0 %595
      %vm597 = vcmask 834560
      %v598 = vsel %vm597, %v588, %v590
      %v599 = vsel %vm597, %v590, %v592
      %v600 = vsel %vm597, %v592, %v594
      %v601 = vsel %vm597, %v594, %v596
      %606 = vst [vmem:[#allocation2 + $0xa0] sm:$0x1c] %v598
      %607 = vst [vmem:[#allocation2 + $0xa8] sm:$0x1c] %v599
      %608 = vst [vmem:[#allocation2 + $0xb0] sm:$0x1c] %v600
      %609 = vst [vmem:[#allocation2 + $0xb8] sm:$0x1c] %v601
      %610 = vrot.lane.b32.xlu0 %v413, 95
      %v611 = vpop.permute.xlu0 %610
      %612 = vrot.lane.b32.xlu0 %v414, 95
      %v613 = vpop.permute.xlu0 %612
      %614 = vrot.lane.b32.xlu0 %v415, 95
      %v615 = vpop.permute.xlu0 %614
      %616 = vrot.lane.b32.xlu0 %v416, 95
      %v617 = vpop.permute.xlu0 %616
      %618 = vrot.lane.b32.xlu0 %v417, 95
      %v619 = vpop.permute.xlu0 %618
      %vm620 = vcmask 777216
      %v621 = vsel %vm620, %v611, %v613
      %v622 = vsel %vm620, %v613, %v615
      %v623 = vsel %vm620, %v615, %v617
      %v624 = vsel %vm620, %v617, %v619
      %629 = vst [vmem:[#allocation2 + $0xa0] sm:$0xe0] %v621
      %630 = vst [vmem:[#allocation2 + $0xa8] sm:$0xe0] %v622
      %631 = vst [vmem:[#allocation2 + $0xb0] sm:$0xe0] %v623
      %632 = vst [vmem:[#allocation2 + $0xb8] sm:$0xe0] %v624
      %633 = vrot.lane.b32.xlu0 %v225, 94
      %v634 = vpop.permute.xlu0 %633
      %635 = vrot.lane.b32.xlu0 %v230, 94
      %v636 = vpop.permute.xlu0 %635
      %637 = vrot.lane.b32.xlu0 %v226, 94
      %v638 = vpop.permute.xlu0 %637
      %639 = vrot.lane.b32.xlu0 %v231, 94
      %v640 = vpop.permute.xlu0 %639
      %641 = vrot.lane.b32.xlu0 %v227, 94
      %v642 = vpop.permute.xlu0 %641
      %vm643 = vcmask 769024
      %v644 = vsel %vm643, %v634, %v636
      %v645 = vsel %vm643, %v636, %v638
      %v646 = vsel %vm643, %v638, %v640
      %v647 = vsel %vm643, %v640, %v642
      %652 = vst [vmem:[#allocation2 + $0xc0] sm:$0x7] %v644
      %653 = vst [vmem:[#allocation2 + $0xc8] sm:$0x7] %v645
      %654 = vst [vmem:[#allocation2 + $0xd0] sm:$0x7] %v646
      %655 = vst [vmem:[#allocation2 + $0xd8] sm:$0x7] %v647
      %656 = vrot.lane.b32.xlu0 %v239, 93
      %v657 = vpop.permute.xlu0 %656
      %658 = vrot.lane.b32.xlu0 %v240, 93
      %v659 = vpop.permute.xlu0 %658
      %660 = vrot.lane.b32.xlu0 %v241, 93
      %v661 = vpop.permute.xlu0 %660
      %662 = vrot.lane.b32.xlu0 %v242, 93
      %v663 = vpop.permute.xlu0 %662
      %664 = vrot.lane.b32.xlu0 %v243, 93
      %v665 = vpop.permute.xlu0 %664
      %vm666 = vcmask 760832
      %v667 = vsel %vm666, %v657, %v659
      %v668 = vsel %vm666, %v659, %v661
      %v669 = vsel %vm666, %v661, %v663
      %v670 = vsel %vm666, %v663, %v665
      %675 = vst [vmem:[#allocation2 + $0xc0] sm:$0x38] %v667
      %676 = vst [vmem:[#allocation2 + $0xc8] sm:$0x38] %v668
      %677 = vst [vmem:[#allocation2 + $0xd0] sm:$0x38] %v669
      %678 = vst [vmem:[#allocation2 + $0xd8] sm:$0x38] %v670
      %679 = vrot.lane.b32.xlu0 %v267, 92
      %v680 = vpop.permute.xlu0 %679
      %681 = vrot.lane.b32.xlu0 %v268, 92
      %v682 = vpop.permute.xlu0 %681
      %683 = vrot.lane.b32.xlu0 %v269, 92
      %v684 = vpop.permute.xlu0 %683
      %685 = vrot.lane.b32.xlu0 %v270, 92
      %v686 = vpop.permute.xlu0 %685
      %687 = vrot.lane.b32.xlu0 %v271, 92
      %v688 = vpop.permute.xlu0 %687
      %vm689 = vcmask 752640
      %v690 = vsel %vm689, %v680, %v682
      %v691 = vsel %vm689, %v682, %v684
      %v692 = vsel %vm689, %v684, %v686
      %v693 = vsel %vm689, %v686, %v688
      %698 = vst [vmem:[#allocation2 + $0xc0] sm:$0xc0] %v690
      %699 = vst [vmem:[#allocation2 + $0xc8] sm:$0xc0] %v691
      %700 = vst [vmem:[#allocation2 + $0xd0] sm:$0xc0] %v692
      %701 = vst [vmem:[#allocation2 + $0xd8] sm:$0xc0] %v693
      %702 = vst [vmem:[#allocation2 + $0xe0] sm:$0x1] %v690
      %703 = vst [vmem:[#allocation2 + $0xe8] sm:$0x1] %v691
      %704 = vst [vmem:[#allocation2 + $0xf0] sm:$0x1] %v692
      %705 = vst [vmem:[#allocation2 + $0xf8] sm:$0x1] %v693
      %706 = vrot.lane.b32.xlu0 %v299, 91
      %v707 = vpop.permute.xlu0 %706
      %708 = vrot.lane.b32.xlu0 %v300, 91
      %v709 = vpop.permute.xlu0 %708
      %710 = vrot.lane.b32.xlu0 %v301, 91
      %v711 = vpop.permute.xlu0 %710
      %712 = vrot.lane.b32.xlu0 %v302, 91
      %v713 = vpop.permute.xlu0 %712
      %714 = vrot.lane.b32.xlu0 %v303, 91
      %v715 = vpop.permute.xlu0 %714
      %vm716 = vcmask 744448
      %v717 = vsel %vm716, %v707, %v709
      %v718 = vsel %vm716, %v709, %v711
      %v719 = vsel %vm716, %v711, %v713
      %v720 = vsel %vm716, %v713, %v715
      %725 = vst [vmem:[#allocation2 + $0xe0] sm:$0xe] %v717
      %726 = vst [vmem:[#allocation2 + $0xe8] sm:$0xe] %v718
      %727 = vst [vmem:[#allocation2 + $0xf0] sm:$0xe] %v719
      %728 = vst [vmem:[#allocation2 + $0xf8] sm:$0xe] %v720
      %729 = vrot.lane.b32.xlu0 %v327, 84
      %v730 = vpop.permute.xlu0 %729
      %731 = vrot.lane.b32.xlu0 %v225, 84
      %v732 = vpop.permute.xlu0 %731
      %733 = vrot.lane.b32.xlu0 %v328, 84
      %v734 = vpop.permute.xlu0 %733
      %735 = vrot.lane.b32.xlu0 %v226, 84
      %v736 = vpop.permute.xlu0 %735
      %737 = vrot.lane.b32.xlu0 %v329, 84
      %v738 = vpop.permute.xlu0 %737
      %vm739 = vcmask 687104
      %v740 = vsel %vm739, %v730, %v732
      %v741 = vsel %vm739, %v732, %v734
      %v742 = vsel %vm739, %v734, %v736
      %v743 = vsel %vm739, %v736, %v738
      %748 = vst [vmem:[#allocation2 + $0xe0] sm:$0x70] %v740
      %749 = vst [vmem:[#allocation2 + $0xe8] sm:$0x70] %v741
      %750 = vst [vmem:[#allocation2 + $0xf0] sm:$0x70] %v742
      %751 = vst [vmem:[#allocation2 + $0xf8] sm:$0x70] %v743
      %752 = vrot.lane.b32.xlu0 %v353, 83
      %v753 = vpop.permute.xlu0 %752
      %754 = vrot.lane.b32.xlu0 %v354, 83
      %v755 = vpop.permute.xlu0 %754
      %756 = vrot.lane.b32.xlu0 %v355, 83
      %v757 = vpop.permute.xlu0 %756
      %758 = vrot.lane.b32.xlu0 %v356, 83
      %v759 = vpop.permute.xlu0 %758
      %760 = vrot.lane.b32.xlu0 %v357, 83
      %v761 = vpop.permute.xlu0 %760
      %vm762 = vcmask 678912
      %v763 = vsel %vm762, %v753, %v755
      %v764 = vsel %vm762, %v755, %v757
      %v765 = vsel %vm762, %v757, %v759
      %v766 = vsel %vm762, %v759, %v761
      %771 = vst [vmem:[#allocation2 + $0xe0] sm:$0x80] %v763
      %772 = vst [vmem:[#allocation2 + $0xe8] sm:$0x80] %v764
      %773 = vst [vmem:[#allocation2 + $0xf0] sm:$0x80] %v765
      %774 = vst [vmem:[#allocation2 + $0xf8] sm:$0x80] %v766
      %775 = vst [vmem:[#allocation2 + $0x100] sm:$0x3] %v763
      %776 = vst [vmem:[#allocation2 + $0x108] sm:$0x3] %v764
      %777 = vst [vmem:[#allocation2 + $0x110] sm:$0x3] %v765
      %778 = vst [vmem:[#allocation2 + $0x118] sm:$0x3] %v766
      %779 = vrot.lane.b32.xlu0 %v385, 82
      %v780 = vpop.permute.xlu0 %779
      %781 = vrot.lane.b32.xlu0 %v386, 82
      %v782 = vpop.permute.xlu0 %781
      %783 = vrot.lane.b32.xlu0 %v387, 82
      %v784 = vpop.permute.xlu0 %783
      %785 = vrot.lane.b32.xlu0 %v388, 82
      %v786 = vpop.permute.xlu0 %785
      %787 = vrot.lane.b32.xlu0 %v389, 82
      %v788 = vpop.permute.xlu0 %787
      %vm789 = vcmask 670720
      %v790 = vsel %vm789, %v780, %v782
      %v791 = vsel %vm789, %v782, %v784
      %v792 = vsel %vm789, %v784, %v786
      %v793 = vsel %vm789, %v786, %v788
      %798 = vst [vmem:[#allocation2 + $0x100] sm:$0x1c] %v790
      %799 = vst [vmem:[#allocation2 + $0x108] sm:$0x1c] %v791
      %800 = vst [vmem:[#allocation2 + $0x110] sm:$0x1c] %v792
      %801 = vst [vmem:[#allocation2 + $0x118] sm:$0x1c] %v793
      %802 = vrot.lane.b32.xlu0 %v413, 81
      %v803 = vpop.permute.xlu0 %802
      %804 = vrot.lane.b32.xlu0 %v414, 81
      %v805 = vpop.permute.xlu0 %804
      %806 = vrot.lane.b32.xlu0 %v415, 81
      %v807 = vpop.permute.xlu0 %806
      %808 = vrot.lane.b32.xlu0 %v416, 81
      %v809 = vpop.permute.xlu0 %808
      %810 = vrot.lane.b32.xlu0 %v417, 81
      %v811 = vpop.permute.xlu0 %810
      %vm812 = vcmask 662528
      %v813 = vsel %vm812, %v803, %v805
      %v814 = vsel %vm812, %v805, %v807
      %v815 = vsel %vm812, %v807, %v809
      %v816 = vsel %vm812, %v809, %v811
      %821 = vst [vmem:[#allocation2 + $0x100] sm:$0xe0] %v813
      %822 = vst [vmem:[#allocation2 + $0x108] sm:$0xe0] %v814
      %823 = vst [vmem:[#allocation2 + $0x110] sm:$0xe0] %v815
      %824 = vst [vmem:[#allocation2 + $0x118] sm:$0xe0] %v816
      %825 = vrot.lane.b32.xlu0 %v225, 80
      %v826 = vpop.permute.xlu0 %825
      %827 = vrot.lane.b32.xlu0 %v230, 80
      %v828 = vpop.permute.xlu0 %827
      %829 = vrot.lane.b32.xlu0 %v226, 80
      %v830 = vpop.permute.xlu0 %829
      %831 = vrot.lane.b32.xlu0 %v231, 80
      %v832 = vpop.permute.xlu0 %831
      %833 = vrot.lane.b32.xlu0 %v227, 80
      %v834 = vpop.permute.xlu0 %833
      %vm835 = vcmask 654336
      %v836 = vsel %vm835, %v826, %v828
      %v837 = vsel %vm835, %v828, %v830
      %v838 = vsel %vm835, %v830, %v832
      %v839 = vsel %vm835, %v832, %v834
      %844 = vst [vmem:[#allocation2 + $0x120] sm:$0x7] %v836
      %845 = vst [vmem:[#allocation2 + $0x128] sm:$0x7] %v837
      %846 = vst [vmem:[#allocation2 + $0x130] sm:$0x7] %v838
      %847 = vst [vmem:[#allocation2 + $0x138] sm:$0x7] %v839
      %v848 = vld [vmem:[%s1] sm:$0xf]
      %v849 = vld [vmem:[#allocation2] sm:$0xff]
      %v850 = vld [vmem:[#allocation2 + $0x8] sm:$0xff]
      %v851 = vld [vmem:[#allocation2 + $0x10] sm:$0xff]
      %v852 = vld [vmem:[#allocation2 + $0x18] sm:$0xff]
      %v853 = vld [vmem:[#allocation2 + $0x20] sm:$0xff]
      %v854 = vld [vmem:[#allocation2 + $0x28] sm:$0xff]
      %v855 = vld [vmem:[#allocation2 + $0x30] sm:$0xff]
      %v856 = vld [vmem:[#allocation2 + $0x38] sm:$0xff]
      %v857 = vld [vmem:[#allocation2 + $0x40] sm:$0xff]
      %v858 = vld [vmem:[#allocation2 + $0x48] sm:$0xff]
      %v859 = vld [vmem:[#allocation2 + $0x50] sm:$0xff]
      %v860 = vld [vmem:[#allocation2 + $0x58] sm:$0xff]
      %v861 = vld [vmem:[#allocation2 + $0x60] sm:$0xff]
      %v862 = vld [vmem:[#allocation2 + $0x68] sm:$0xff]
      %v863 = vld [vmem:[#allocation2 + $0x70] sm:$0xff]
      %v864 = vld [vmem:[#allocation2 + $0x78] sm:$0xff]
      %v865 = vld [vmem:[#allocation2 + $0x80] sm:$0xff]
      %v866 = vld [vmem:[#allocation2 + $0x88] sm:$0xff]
      %v867 = vld [vmem:[#allocation2 + $0x90] sm:$0xff]
      %v868 = vld [vmem:[#allocation2 + $0x98] sm:$0xff]
      %v869 = vld [vmem:[#allocation2 + $0xa0] sm:$0xff]
      %v870 = vld [vmem:[#allocation2 + $0xa8] sm:$0xff]
      %v871 = vld [vmem:[#allocation2 + $0xb0] sm:$0xff]
      %v872 = vld [vmem:[#allocation2 + $0xb8] sm:$0xff]
      %v873 = vld [vmem:[#allocation2 + $0xc0] sm:$0xff]
      %v874 = vld [vmem:[#allocation2 + $0xc8] sm:$0xff]
      %v875 = vld [vmem:[#allocation2 + $0xd0] sm:$0xff]
      %v876 = vld [vmem:[#allocation2 + $0xd8] sm:$0xff]
      %v877 = vld [vmem:[#allocation2 + $0xe0] sm:$0xff]
      %v878 = vld [vmem:[#allocation2 + $0xe8] sm:$0xff]
      %v879 = vld [vmem:[#allocation2 + $0xf0] sm:$0xff]
      %v880 = vld [vmem:[#allocation2 + $0xf8] sm:$0xff]
      %v881 = vld [vmem:[#allocation2 + $0x100] sm:$0xff]
      %v882 = vld [vmem:[#allocation2 + $0x108] sm:$0xff]
      %v883 = vld [vmem:[#allocation2 + $0x110] sm:$0xff]
      %v884 = vld [vmem:[#allocation2 + $0x118] sm:$0xff]
      %v885 = vld [vmem:[#allocation2 + $0x120] sm:$0x7]
      %v886 = vld [vmem:[#allocation2 + $0x128] sm:$0x7]
      %v887 = vld [vmem:[#allocation2 + $0x130] sm:$0x7]
      %v888 = vld [vmem:[#allocation2 + $0x138] sm:$0x7]
      %v889 = vld [vmem:[%s2] sm:$0xf]
      %891 = vset.pattern.permute.xlu0 0
      %892 = vperm.xlu0 %891, %v889
      %v893 = vpop.permute.xlu0 %892
      %vm895 = vcmask 613376
      %v897 = vsel %vm895, %v848, 0
      %vm899 = vcmask 1042432
      %v901 = vsel %vm899, %v885, 0
      %v904 = vsel %vm899, %v886, 0
      %v907 = vsel %vm899, %v887, 0
      %v910 = vsel %vm899, %v888, 0
      %912 = vmatprep.subr.mxu0 %v850
      %913 = vmatpush1.msra.mxu0 %v849
      %914 = vmatprep.subr.mxu0 %v854
      %915 = vmatpush1.msra.mxu0 %v853
      %916 = vmatprep.subr.mxu0 %v858
      %917 = vmatpush1.msra.mxu0 %v857
      %918 = vmatprep.subr.mxu0 %v862
      %919 = vmatpush1.msra.mxu0 %v861
      %920 = vmatprep.subr.mxu0 %v866
      %921 = vmatpush1.msra.mxu0 %v865
      %922 = vmatprep.subr.mxu0 %v870
      %923 = vmatpush1.msra.mxu0 %v869
      %924 = vmatprep.subr.mxu0 %v874
      %925 = vmatpush1.msra.mxu0 %v873
      %926 = vmatprep.subr.mxu0 %v878
      %927 = vmatpush1.msra.mxu0 %v877
      %928 = vmatprep.subr.mxu0 %v882
      %929 = vmatpush1.msra.mxu0 %v881
      %930 = vmatprep.subr.mxu0 %v904
      %931 = vmatpush1.msra.mxu0 %v901
      %932 = vmatprep.subr.mxu0 0.0
      %933 = vmatpush1.msra.mxu0 0.0
      %934 = vmatprep.subr.mxu0 0.0
      %935 = vmatpush1.msra.mxu0 0.0
      %936 = vmatprep.subr.mxu0 0.0
      %937 = vmatpush1.msra.mxu0 0.0
      %938 = vmatprep.subr.mxu0 0.0
      %939 = vmatpush1.msra.mxu0 0.0
      %940 = vmatprep.subr.mxu0 0.0
      %941 = vmatpush1.msra.mxu0 0.0
      %942 = vmatprep.subr.mxu0 0.0
      %943 = vmatpush1.msra.mxu0 0.0
      %944 = vmatprep.subr.mxu0 0.0
      %945 = vmatpush1.msra.mxu0 0.0
      %946 = vmatprep.subr.mxu0 0.0
      %947 = vmatpush1.msra.mxu0 0.0
      %948 = vmatprep.subr.mxu0 0.0
      %949 = vmatpush1.msra.mxu0 0.0
      %950 = vmatprep.subr.mxu0 0.0
      %951 = vmatpush1.msra.mxu0 0.0
      %952 = vmatprep.subr.mxu0 0.0
      %953 = vmatpush1.msra.mxu0 0.0
      %954 = vmatprep.subr.mxu0 0.0
      %955 = vmatpush1.msra.mxu0 0.0
      %956 = vmatprep.subr.mxu0 0.0
      %957 = vmatpush1.msra.mxu0 0.0
      %958 = vmatprep.subr.mxu0 0.0
      %959 = vmatpush1.msra.mxu0 0.0
      %960 = vmatprep.subr.mxu0 0.0
      %961 = vmatpush1.msra.mxu0 0.0
      %962 = vmatprep.subr.mxu0 0.0
      %963 = vmatpush1.msra.mxu0 0.0
      %964 = vmatprep.subr.mxu0 0.0
      %965 = vmatpush1.msra.mxu0 0.0
      %966 = vmatprep.subr.mxu0 0.0
      %967 = vmatpush1.msra.mxu0 0.0
      %968 = vmatprep.subr.mxu0 0.0
      %969 = vmatpush1.msra.mxu0 0.0
      %970 = vmatprep.subr.mxu0 0.0
      %971 = vmatpush1.msra.mxu0 0.0
      %972 = vmatprep.subr.mxu0 0.0
      %973 = vmatpush1.msra.mxu0 0.0
      %974 = vmatprep.subr.mxu0 0.0
      %975 = vmatpush1.msra.mxu0 0.0
      %976 = vmatprep.mubr.f32.mxu0 0.0
      %977 = vmatmul.mubr.f32.gmra.mrb[0].mxu0 %v897
      %v978 = vpop.f32.mrb[0].mxu0
      %v979 = vadd.f32 %v893, %v978
      %v980 = vpop.f32.mrb[0].mxu0
      %v981 = vadd.f32 %v893, %v980
      %982 = vdwg.mxu0
      %983 = vmatprep.subr.mxu0 %v852
      %984 = vmatpush1.msra.mxu0 %v851
      %985 = vmatprep.subr.mxu0 %v856
      %986 = vmatpush1.msra.mxu0 %v855
      %987 = vmatprep.subr.mxu0 %v860
      %988 = vmatpush1.msra.mxu0 %v859
      %989 = vmatprep.subr.mxu0 %v864
      %990 = vmatpush1.msra.mxu0 %v863
      %991 = vmatprep.subr.mxu0 %v868
      %992 = vmatpush1.msra.mxu0 %v867
      %993 = vmatprep.subr.mxu0 %v872
      %994 = vmatpush1.msra.mxu0 %v871
      %995 = vmatprep.subr.mxu0 %v876
      %996 = vmatpush1.msra.mxu0 %v875
      %997 = vmatprep.subr.mxu0 %v880
      %998 = vmatpush1.msra.mxu0 %v879
      %999 = vmatprep.subr.mxu0 %v884
      %1000 = vmatpush1.msra.mxu0 %v883
      %1001 = vmatprep.subr.mxu0 %v910
      %1002 = vmatpush1.msra.mxu0 %v907
      %1003 = vmatprep.subr.mxu0 0.0
      %1004 = vmatpush1.msra.mxu0 0.0
      %1005 = vmatprep.subr.mxu0 0.0
      %1006 = vmatpush1.msra.mxu0 0.0
      %1007 = vmatprep.subr.mxu0 0.0
      %1008 = vmatpush1.msra.mxu0 0.0
      %1009 = vmatprep.subr.mxu0 0.0
      %1010 = vmatpush1.msra.mxu0 0.0
      %1011 = vmatprep.subr.mxu0 0.0
      %1012 = vmatpush1.msra.mxu0 0.0
      %1013 = vmatprep.subr.mxu0 0.0
      %1014 = vmatpush1.msra.mxu0 0.0
      %1015 = vmatprep.subr.mxu0 0.0
      %1016 = vmatpush1.msra.mxu0 0.0
      %1017 = vmatprep.subr.mxu0 0.0
      %1018 = vmatpush1.msra.mxu0 0.0
      %1019 = vmatprep.subr.mxu0 0.0
      %1020 = vmatpush1.msra.mxu0 0.0
      %1021 = vmatprep.subr.mxu0 0.0
      %1022 = vmatpush1.msra.mxu0 0.0
      %1023 = vmatprep.subr.mxu0 0.0
      %1024 = vmatpush1.msra.mxu0 0.0
      %1025 = vmatprep.subr.mxu0 0.0
      %1026 = vmatpush1.msra.mxu0 0.0
      %1027 = vmatprep.subr.mxu0 0.0
      %1028 = vmatpush1.msra.mxu0 0.0
      %1029 = vmatprep.subr.mxu0 0.0
      %1030 = vmatpush1.msra.mxu0 0.0
      %1031 = vmatprep.subr.mxu0 0.0
      %1032 = vmatpush1.msra.mxu0 0.0
      %1033 = vmatprep.subr.mxu0 0.0
      %1034 = vmatpush1.msra.mxu0 0.0
      %1035 = vmatprep.subr.mxu0 0.0
      %1036 = vmatpush1.msra.mxu0 0.0
      %1037 = vmatprep.subr.mxu0 0.0
      %1038 = vmatpush1.msra.mxu0 0.0
      %1039 = vmatprep.subr.mxu0 0.0
      %1040 = vmatpush1.msra.mxu0 0.0
      %1041 = vmatprep.subr.mxu0 0.0
      %1042 = vmatpush1.msra.mxu0 0.0
      %1043 = vmatprep.subr.mxu0 0.0
      %1044 = vmatpush1.msra.mxu0 0.0
      %1045 = vmatprep.subr.mxu0 0.0
      %1046 = vmatpush1.msra.mxu0 0.0
      %1047 = vmatprep.mubr.f32.mxu0 0.0
      %1048 = vmatmul.mubr.f32.gmra.mrb[0].mxu0 %v897
      %v1049 = vpop.f32.mrb[0].mxu0
      %v1050 = vadd.f32 %v893, %v1049
      %v1051 = vpop.f32.mrb[0].mxu0
      %v1052 = vadd.f32 %v893, %v1051
      %1053 = vdwg.mxu0
      %v1054 = vmax.f32 %v979, 0.0
      %v1055 = vmax.f32 %v981, 0.0
      %v1056 = vmax.f32 %v1050, 0.0
      %v1057 = vmax.f32 %v1052, 0.0
      %v1062 = vcombine.low %v1054, %v1055
      %v1063 = vcombine.low %v1056, %v1057
      %1066 = vst [vmem:[#allocation4] sm:$0xff] %v1062
      %1067 = vst [vmem:[#allocation4 + $0x8] sm:$0xff] %v1063
      %1068 = vst [vmem:[#allocation4 + $0x10] sm:$0xf] 0.0
      %v1069 = vld [vmem:[#allocation4] sm:$0xff]
      %v1070 = vld [vmem:[#allocation4 + $0x8] sm:$0xff]
      %v1071 = vld [vmem:[#allocation4 + $0x10] sm:$0xf]
      %v1074 = vcombine.high %v1069, %v1069
      %v1075 = vcombine.high %v1070, %v1070
      %1078 = vst [vmem:[#allocation3] sm:$0xf] %v1069
      %1079 = vst [vmem:[#allocation3 + $0x8] sm:$0xf] %v1074
      %1080 = vst [vmem:[#allocation3 + $0x10] sm:$0xf] %v1070
      %1081 = vst [vmem:[#allocation3 + $0x18] sm:$0xf] %v1075
      %v1083 = vcombine.low %v1069, %v1069
      %v1084 = vcombine.low %v1070, %v1070
      %v1085 = vcombine.low %v1071, %v1071
      %1086 = vrot.lane.b32.xlu0 %v1083, 127
      %v1087 = vpop.permute.xlu0 %1086
      %1088 = vrot.lane.b32.xlu0 %v1069, 127
      %v1089 = vpop.permute.xlu0 %1088
      %1090 = vrot.lane.b32.xlu0 %v1084, 127
      %v1091 = vpop.permute.xlu0 %1090
      %1092 = vrot.lane.b32.xlu0 %v1070, 127
      %v1093 = vpop.permute.xlu0 %1092
      %1094 = vrot.lane.b32.xlu0 %v1085, 127
      %v1095 = vpop.permute.xlu0 %1094
      %v1096 = vsel %vm254, %v1087, %v1089
      %v1097 = vsel %vm254, %v1089, %v1091
      %v1098 = vsel %vm254, %v1091, %v1093
      %v1099 = vsel %vm254, %v1093, %v1095
      %1104 = vst [vmem:[#allocation3] sm:$0xf0] %v1096
      %1105 = vst [vmem:[#allocation3 + $0x8] sm:$0xf0] %v1097
      %1106 = vst [vmem:[#allocation3 + $0x10] sm:$0xf0] %v1098
      %1107 = vst [vmem:[#allocation3 + $0x18] sm:$0xf0] %v1099
      %1108 = vrot.lane.b32.xlu0 %v1069, 126
      %v1109 = vpop.permute.xlu0 %1108
      %1110 = vrot.lane.b32.xlu0 %v1074, 126
      %v1111 = vpop.permute.xlu0 %1110
      %1112 = vrot.lane.b32.xlu0 %v1070, 126
      %v1113 = vpop.permute.xlu0 %1112
      %1114 = vrot.lane.b32.xlu0 %v1075, 126
      %v1115 = vpop.permute.xlu0 %1114
      %1116 = vrot.lane.b32.xlu0 %v1071, 126
      %v1117 = vpop.permute.xlu0 %1116
      %v1118 = vsel %vm282, %v1109, %v1111
      %v1119 = vsel %vm282, %v1111, %v1113
      %v1120 = vsel %vm282, %v1113, %v1115
      %v1121 = vsel %vm282, %v1115, %v1117
      %1126 = vst [vmem:[#allocation3 + $0x20] sm:$0xf] %v1118
      %1127 = vst [vmem:[#allocation3 + $0x28] sm:$0xf] %v1119
      %1128 = vst [vmem:[#allocation3 + $0x30] sm:$0xf] %v1120
      %1129 = vst [vmem:[#allocation3 + $0x38] sm:$0xf] %v1121
      %1130 = vrot.lane.b32.xlu0 %v1083, 117
      %v1131 = vpop.permute.xlu0 %1130
      %1132 = vrot.lane.b32.xlu0 %v1069, 117
      %v1133 = vpop.permute.xlu0 %1132
      %1134 = vrot.lane.b32.xlu0 %v1084, 117
      %v1135 = vpop.permute.xlu0 %1134
      %1136 = vrot.lane.b32.xlu0 %v1070, 117
      %v1137 = vpop.permute.xlu0 %1136
      %1138 = vrot.lane.b32.xlu0 %v1085, 117
      %v1139 = vpop.permute.xlu0 %1138
      %v1140 = vsel %vm368, %v1131, %v1133
      %v1141 = vsel %vm368, %v1133, %v1135
      %v1142 = vsel %vm368, %v1135, %v1137
      %v1143 = vsel %vm368, %v1137, %v1139
      %1148 = vst [vmem:[#allocation3 + $0x20] sm:$0xf0] %v1140
      %1149 = vst [vmem:[#allocation3 + $0x28] sm:$0xf0] %v1141
      %1150 = vst [vmem:[#allocation3 + $0x30] sm:$0xf0] %v1142
      %1151 = vst [vmem:[#allocation3 + $0x38] sm:$0xf0] %v1143
      %1152 = vrot.lane.b32.xlu0 %v1069, 116
      %v1153 = vpop.permute.xlu0 %1152
      %1154 = vrot.lane.b32.xlu0 %v1074, 116
      %v1155 = vpop.permute.xlu0 %1154
      %1156 = vrot.lane.b32.xlu0 %v1070, 116
      %v1157 = vpop.permute.xlu0 %1156
      %1158 = vrot.lane.b32.xlu0 %v1075, 116
      %v1159 = vpop.permute.xlu0 %1158
      %1160 = vrot.lane.b32.xlu0 %v1071, 116
      %v1161 = vpop.permute.xlu0 %1160
      %v1162 = vsel %vm400, %v1153, %v1155
      %v1163 = vsel %vm400, %v1155, %v1157
      %v1164 = vsel %vm400, %v1157, %v1159
      %v1165 = vsel %vm400, %v1159, %v1161
      %1170 = vst [vmem:[#allocation3 + $0x40] sm:$0xf] %v1162
      %1171 = vst [vmem:[#allocation3 + $0x48] sm:$0xf] %v1163
      %1172 = vst [vmem:[#allocation3 + $0x50] sm:$0xf] %v1164
      %1173 = vst [vmem:[#allocation3 + $0x58] sm:$0xf] %v1165
      %1174 = vrot.lane.b32.xlu0 %v1083, 115
      %v1175 = vpop.permute.xlu0 %1174
      %1176 = vrot.lane.b32.xlu0 %v1069, 115
      %v1177 = vpop.permute.xlu0 %1176
      %1178 = vrot.lane.b32.xlu0 %v1084, 115
      %v1179 = vpop.permute.xlu0 %1178
      %1180 = vrot.lane.b32.xlu0 %v1070, 115
      %v1181 = vpop.permute.xlu0 %1180
      %1182 = vrot.lane.b32.xlu0 %v1085, 115
      %v1183 = vpop.permute.xlu0 %1182
      %v1184 = vsel %vm428, %v1175, %v1177
      %v1185 = vsel %vm428, %v1177, %v1179
      %v1186 = vsel %vm428, %v1179, %v1181
      %v1187 = vsel %vm428, %v1181, %v1183
      %1192 = vst [vmem:[#allocation3 + $0x40] sm:$0xf0] %v1184
      %1193 = vst [vmem:[#allocation3 + $0x48] sm:$0xf0] %v1185
      %1194 = vst [vmem:[#allocation3 + $0x50] sm:$0xf0] %v1186
      %1195 = vst [vmem:[#allocation3 + $0x58] sm:$0xf0] %v1187
      %1196 = vrot.lane.b32.xlu0 %v1069, 106
      %v1197 = vpop.permute.xlu0 %1196
      %1198 = vrot.lane.b32.xlu0 %v1074, 106
      %v1199 = vpop.permute.xlu0 %1198
      %1200 = vrot.lane.b32.xlu0 %v1070, 106
      %v1201 = vpop.permute.xlu0 %1200
      %1202 = vrot.lane.b32.xlu0 %v1075, 106
      %v1203 = vpop.permute.xlu0 %1202
      %1204 = vrot.lane.b32.xlu0 %v1071, 106
      %v1205 = vpop.permute.xlu0 %1204
      %v1206 = vsel %vm497, %v1197, %v1199
      %v1207 = vsel %vm497, %v1199, %v1201
      %v1208 = vsel %vm497, %v1201, %v1203
      %v1209 = vsel %vm497, %v1203, %v1205
      %1214 = vst [vmem:[#allocation3 + $0x60] sm:$0xf] %v1206
      %1215 = vst [vmem:[#allocation3 + $0x68] sm:$0xf] %v1207
      %1216 = vst [vmem:[#allocation3 + $0x70] sm:$0xf] %v1208
      %1217 = vst [vmem:[#allocation3 + $0x78] sm:$0xf] %v1209
      %1218 = vrot.lane.b32.xlu0 %v1083, 105
      %v1219 = vpop.permute.xlu0 %1218
      %1220 = vrot.lane.b32.xlu0 %v1069, 105
      %v1221 = vpop.permute.xlu0 %1220
      %1222 = vrot.lane.b32.xlu0 %v1084, 105
      %v1223 = vpop.permute.xlu0 %1222
      %1224 = vrot.lane.b32.xlu0 %v1070, 105
      %v1225 = vpop.permute.xlu0 %1224
      %1226 = vrot.lane.b32.xlu0 %v1085, 105
      %v1227 = vpop.permute.xlu0 %1226
      %v1228 = vsel %vm524, %v1219, %v1221
      %v1229 = vsel %vm524, %v1221, %v1223
      %v1230 = vsel %vm524, %v1223, %v1225
      %v1231 = vsel %vm524, %v1225, %v1227
      %1236 = vst [vmem:[#allocation3 + $0x60] sm:$0xf0] %v1228
      %1237 = vst [vmem:[#allocation3 + $0x68] sm:$0xf0] %v1229
      %1238 = vst [vmem:[#allocation3 + $0x70] sm:$0xf0] %v1230
      %1239 = vst [vmem:[#allocation3 + $0x78] sm:$0xf0] %v1231
      %1240 = vrot.lane.b32.xlu0 %v1069, 104
      %v1241 = vpop.permute.xlu0 %1240
      %1242 = vrot.lane.b32.xlu0 %v1074, 104
      %v1243 = vpop.permute.xlu0 %1242
      %1244 = vrot.lane.b32.xlu0 %v1070, 104
      %v1245 = vpop.permute.xlu0 %1244
      %1246 = vrot.lane.b32.xlu0 %v1075, 104
      %v1247 = vpop.permute.xlu0 %1246
      %1248 = vrot.lane.b32.xlu0 %v1071, 104
      %v1249 = vpop.permute.xlu0 %1248
      %v1250 = vsel %vm547, %v1241, %v1243
      %v1251 = vsel %vm547, %v1243, %v1245
      %v1252 = vsel %vm547, %v1245, %v1247
      %v1253 = vsel %vm547, %v1247, %v1249
      %1258 = vst [vmem:[#allocation3 + $0x80] sm:$0xf] %v1250
      %1259 = vst [vmem:[#allocation3 + $0x88] sm:$0xf] %v1251
      %1260 = vst [vmem:[#allocation3 + $0x90] sm:$0xf] %v1252
      %1261 = vst [vmem:[#allocation3 + $0x98] sm:$0xf] %v1253
      %v1262 = vld [vmem:[%s3] sm:$0x3]
      %v1263 = vld [vmem:[#allocation3] sm:$0xff]
      %v1264 = vld [vmem:[#allocation3 + $0x8] sm:$0xff]
      %v1265 = vld [vmem:[#allocation3 + $0x10] sm:$0xff]
      %v1266 = vld [vmem:[#allocation3 + $0x18] sm:$0xff]
      %v1267 = vld [vmem:[#allocation3 + $0x20] sm:$0xff]
      %v1268 = vld [vmem:[#allocation3 + $0x28] sm:$0xff]
      %v1269 = vld [vmem:[#allocation3 + $0x30] sm:$0xff]
      %v1270 = vld [vmem:[#allocation3 + $0x38] sm:$0xff]
      %v1271 = vld [vmem:[#allocation3 + $0x40] sm:$0xff]
      %v1272 = vld [vmem:[#allocation3 + $0x48] sm:$0xff]
      %v1273 = vld [vmem:[#allocation3 + $0x50] sm:$0xff]
      %v1274 = vld [vmem:[#allocation3 + $0x58] sm:$0xff]
      %v1275 = vld [vmem:[#allocation3 + $0x60] sm:$0xff]
      %v1276 = vld [vmem:[#allocation3 + $0x68] sm:$0xff]
      %v1277 = vld [vmem:[#allocation3 + $0x70] sm:$0xff]
      %v1278 = vld [vmem:[#allocation3 + $0x78] sm:$0xff]
      %v1279 = vld [vmem:[#allocation3 + $0x80] sm:$0xf]
      %v1280 = vld [vmem:[#allocation3 + $0x88] sm:$0xf]
      %v1281 = vld [vmem:[#allocation3 + $0x90] sm:$0xf]
      %v1282 = vld [vmem:[#allocation3 + $0x98] sm:$0xf]
      %v1283 = vld [vmem:[%s4] sm:$0x3]
      %1285 = vset.pattern.permute.xlu0 0
      %1286 = vperm.xlu0 %1285, %v1283
      %v1287 = vpop.permute.xlu0 %1286
      %vm1289 = vcmask 293888
      %v1291 = vsel %vm1289, %v1262, 0
      %vm1293 = vcmask 1043456
      %v1295 = vsel %vm1293, %v1279, 0
      %v1298 = vsel %vm1293, %v1280, 0
      %v1301 = vsel %vm1293, %v1281, 0
      %v1304 = vsel %vm1293, %v1282, 0
      %1306 = vmatprep.subr.mxu0 %v1264
      %1307 = vmatpush1.msra.mxu0 %v1263
      %1308 = vmatprep.subr.mxu0 %v1268
      %1309 = vmatpush1.msra.mxu0 %v1267
      %1310 = vmatprep.subr.mxu0 %v1272
      %1311 = vmatpush1.msra.mxu0 %v1271
      %1312 = vmatprep.subr.mxu0 %v1276
      %1313 = vmatpush1.msra.mxu0 %v1275
      %1314 = vmatprep.subr.mxu0 %v1298
      %1315 = vmatpush1.msra.mxu0 %v1295
      %1316 = vmatprep.subr.mxu0 0.0
      %1317 = vmatpush1.msra.mxu0 0.0
      %1318 = vmatprep.subr.mxu0 0.0
      %1319 = vmatpush1.msra.mxu0 0.0
      %1320 = vmatprep.subr.mxu0 0.0
      %1321 = vmatpush1.msra.mxu0 0.0
      %1322 = vmatprep.subr.mxu0 0.0
      %1323 = vmatpush1.msra.mxu0 0.0
      %1324 = vmatprep.subr.mxu0 0.0
      %1325 = vmatpush1.msra.mxu0 0.0
      %1326 = vmatprep.subr.mxu0 0.0
      %1327 = vmatpush1.msra.mxu0 0.0
      %1328 = vmatprep.subr.mxu0 0.0
      %1329 = vmatpush1.msra.mxu0 0.0
      %1330 = vmatprep.subr.mxu0 0.0
      %1331 = vmatpush1.msra.mxu0 0.0
      %1332 = vmatprep.subr.mxu0 0.0
      %1333 = vmatpush1.msra.mxu0 0.0
      %1334 = vmatprep.subr.mxu0 0.0
      %1335 = vmatpush1.msra.mxu0 0.0
      %1336 = vmatprep.subr.mxu0 0.0
      %1337 = vmatpush1.msra.mxu0 0.0
      %1338 = vmatprep.subr.mxu0 0.0
      %1339 = vmatpush1.msra.mxu0 0.0
      %1340 = vmatprep.subr.mxu0 0.0
      %1341 = vmatpush1.msra.mxu0 0.0
      %1342 = vmatprep.subr.mxu0 0.0
      %1343 = vmatpush1.msra.mxu0 0.0
      %1344 = vmatprep.subr.mxu0 0.0
      %1345 = vmatpush1.msra.mxu0 0.0
      %1346 = vmatprep.subr.mxu0 0.0
      %1347 = vmatpush1.msra.mxu0 0.0
      %1348 = vmatprep.subr.mxu0 0.0
      %1349 = vmatpush1.msra.mxu0 0.0
      %1350 = vmatprep.subr.mxu0 0.0
      %1351 = vmatpush1.msra.mxu0 0.0
      %1352 = vmatprep.subr.mxu0 0.0
      %1353 = vmatpush1.msra.mxu0 0.0
      %1354 = vmatprep.subr.mxu0 0.0
      %1355 = vmatpush1.msra.mxu0 0.0
      %1356 = vmatprep.subr.mxu0 0.0
      %1357 = vmatpush1.msra.mxu0 0.0
      %1358 = vmatprep.subr.mxu0 0.0
      %1359 = vmatpush1.msra.mxu0 0.0
      %1360 = vmatprep.subr.mxu0 0.0
      %1361 = vmatpush1.msra.mxu0 0.0
      %1362 = vmatprep.subr.mxu0 0.0
      %1363 = vmatpush1.msra.mxu0 0.0
      %1364 = vmatprep.subr.mxu0 0.0
      %1365 = vmatpush1.msra.mxu0 0.0
      %1366 = vmatprep.subr.mxu0 0.0
      %1367 = vmatpush1.msra.mxu0 0.0
      %1368 = vmatprep.subr.mxu0 0.0
      %1369 = vmatpush1.msra.mxu0 0.0
      %1370 = vmatprep.mubr.f32.mxu0 0.0
      %1371 = vmatmul.mubr.f32.gmra.mrb[0].mxu0 %v1291
      %v1372 = vpop.f32.mrb[0].mxu0
      %v1373 = vadd.f32 %v1287, %v1372
      %v1374 = vpop.f32.mrb[0].mxu0
      %v1375 = vadd.f32 %v1287, %v1374
      %1376 = vdwg.mxu0
      %1377 = vmatprep.subr.mxu0 %v1266
      %1378 = vmatpush1.msra.mxu0 %v1265
      %1379 = vmatprep.subr.mxu0 %v1270
      %1380 = vmatpush1.msra.mxu0 %v1269
      %1381 = vmatprep.subr.mxu0 %v1274
      %1382 = vmatpush1.msra.mxu0 %v1273
      %1383 = vmatprep.subr.mxu0 %v1278
      %1384 = vmatpush1.msra.mxu0 %v1277
      %1385 = vmatprep.subr.mxu0 %v1304
      %1386 = vmatpush1.msra.mxu0 %v1301
      %1387 = vmatprep.subr.mxu0 0.0
      %1388 = vmatpush1.msra.mxu0 0.0
      %1389 = vmatprep.subr.mxu0 0.0
      %1390 = vmatpush1.msra.mxu0 0.0
      %1391 = vmatprep.subr.mxu0 0.0
      %1392 = vmatpush1.msra.mxu0 0.0
      %1393 = vmatprep.subr.mxu0 0.0
      %1394 = vmatpush1.msra.mxu0 0.0
      %1395 = vmatprep.subr.mxu0 0.0
      %1396 = vmatpush1.msra.mxu0 0.0
      %1397 = vmatprep.subr.mxu0 0.0
      %1398 = vmatpush1.msra.mxu0 0.0
      %1399 = vmatprep.subr.mxu0 0.0
      %1400 = vmatpush1.msra.mxu0 0.0
      %1401 = vmatprep.subr.mxu0 0.0
      %1402 = vmatpush1.msra.mxu0 0.0
      %1403 = vmatprep.subr.mxu0 0.0
      %1404 = vmatpush1.msra.mxu0 0.0
      %1405 = vmatprep.subr.mxu0 0.0
      %1406 = vmatpush1.msra.mxu0 0.0
      %1407 = vmatprep.subr.mxu0 0.0
      %1408 = vmatpush1.msra.mxu0 0.0
      %1409 = vmatprep.subr.mxu0 0.0
      %1410 = vmatpush1.msra.mxu0 0.0
      %1411 = vmatprep.subr.mxu0 0.0
      %1412 = vmatpush1.msra.mxu0 0.0
      %1413 = vmatprep.subr.mxu0 0.0
      %1414 = vmatpush1.msra.mxu0 0.0
      %1415 = vmatprep.subr.mxu0 0.0
      %1416 = vmatpush1.msra.mxu0 0.0
      %1417 = vmatprep.subr.mxu0 0.0
      %1418 = vmatpush1.msra.mxu0 0.0
      %1419 = vmatprep.subr.mxu0 0.0
      %1420 = vmatpush1.msra.mxu0 0.0
      %1421 = vmatprep.subr.mxu0 0.0
      %1422 = vmatpush1.msra.mxu0 0.0
      %1423 = vmatprep.subr.mxu0 0.0
      %1424 = vmatpush1.msra.mxu0 0.0
      %1425 = vmatprep.subr.mxu0 0.0
      %1426 = vmatpush1.msra.mxu0 0.0
      %1427 = vmatprep.subr.mxu0 0.0
      %1428 = vmatpush1.msra.mxu0 0.0
      %1429 = vmatprep.subr.mxu0 0.0
      %1430 = vmatpush1.msra.mxu0 0.0
      %1431 = vmatprep.subr.mxu0 0.0
      %1432 = vmatpush1.msra.mxu0 0.0
      %1433 = vmatprep.subr.mxu0 0.0
      %1434 = vmatpush1.msra.mxu0 0.0
      %1435 = vmatprep.subr.mxu0 0.0
      %1436 = vmatpush1.msra.mxu0 0.0
      %1437 = vmatprep.subr.mxu0 0.0
      %1438 = vmatpush1.msra.mxu0 0.0
      %1439 = vmatprep.subr.mxu0 0.0
      %1440 = vmatpush1.msra.mxu0 0.0
      %1441 = vmatprep.mubr.f32.mxu0 0.0
      %1442 = vmatmul.mubr.f32.gmra.mrb[0].mxu0 %v1291
      %v1443 = vpop.f32.mrb[0].mxu0
      %v1444 = vadd.f32 %v1287, %v1443
      %v1445 = vpop.f32.mrb[0].mxu0
      %v1446 = vadd.f32 %v1287, %v1445
      %1447 = vdwg.mxu0
      %v1452 = vcombine.low %v1373, %v1375
      %v1453 = vcombine.low %v1444, %v1446
      %v1455 = vunpack.c.l.s4 1983009808
      %v1456 = vunpack.c.0.s8 %v1455
      %v1457 = vlaneseq
      %v1458 = vshrl.u32 %v1457, 7
      %v1459 = vsub.s32 %v1456, %v1458
      %v1460 = vrot.slane %v1452, %v1459
      %v1462 = vunpack.c.l.s4 1983009808
      %v1463 = vunpack.c.0.s8 %v1462
      %v1464 = vlaneseq
      %v1465 = vshrl.u32 %v1464, 7
      %v1466 = vsub.s32 %v1463, %v1465
      %v1467 = vrot.slane %v1453, %v1466
      %v1468 = vcombine.low %v1460, %v1467
      %1470 = vst [vmem:[%s224] sm:$0xff] %v1468
      %p1471 = scmp.lt.s32.totalorder %s16, 1
      %s1472 = scalar_select %p1471, %s16, 1
      %s1473 = smul.addr %s1472, 4
      %s1474 = smul.addr %s1473, 2
      %s1475 = scalar_lea.vmem %s5, %s1474
      // Predicated region
      $region41: #{cnn_forward.1} parent=39 // pred_check
        %p1476 = pneg %p144
      $region42: #{cnn_forward.1} parent=39 // pred_check_branch
        %1478 = sbr.rel (%p1476) target = $region44
      $region43: #{cnn_forward.1} parent=39 // pred_region
        _
      $region44: #{cnn_forward.1} parent=39 // pred_fallthru
        _
    $region40: #{cnn_forward.1} parent=5 // pred_fallthru
      _
    %p1479 = scmp.le.s32.totalorder 2, %s11
    // Predicated region
    $region45: #{cnn_forward.1} parent=5 // pred_check
      %p1480 = pneg %p1479
    $region46: #{cnn_forward.1} parent=5 // pred_check_branch
      %1482 = sbr.rel (%p1480) target = $region48
    $region47: #{cnn_forward.1} parent=5 // pred_region
      %s1483 = ssub.s32 %s11, 2
      // Predicated region
      $region49: #{cnn_forward.1} parent=47 // pred_check
        %p1484 = pneg %p150
      $region50: #{cnn_forward.1} parent=47 // pred_check_branch
        %1486 = sbr.rel (%p1484) target = $region52
      $region51: #{cnn_forward.1} parent=47 // pred_region
        %p1487 = scmp.lt.s32.totalorder %s17, 1
        %s1488 = scalar_select %p1487, %s17, 1
        %s1489 = smul.addr %s1488, 4
        %s1490 = smul.addr %s1489, 2
        %s1491 = scalar_lea.vmem %s5, %s1490
      $region52: #{cnn_forward.1} parent=47 // pred_fallthru
        _
    $region48: #{cnn_forward.1} parent=5 // pred_fallthru
      _
  $region6: #{cnn_forward.1} parent=0 // loop_footer
    %s15 = sadd.s32 1, %s11
  $region7: #{cnn_forward.1} parent=0 // loop_footer_branch
    %10 = sbr.rel target = $region3
  $region8: #{cnn_forward.1} parent=0 // loop_exit
    _

</llo_original>
